<compile_context>
chip_gen: v7x
topology: tpu7x:2x2x1
jax: 0.10.0
libtpu: 0.0.40
codegen_flags: <defaults>
</compile_context>

<pallas_src>
import jax
import jax.numpy as jnp
from jax import lax
from jax.experimental import pallas as pl
from jax.experimental.pallas import tpu as pltpu

NEG_SLOPE = 0.01  # PyTorch LeakyReLU default negative_slope


def _leaky_relu(x):
    return jnp.where(x > 0, x, NEG_SLOPE * x)


# ---------------------------------------------------------------------------
# Pallas kernel 1: fused bidirectional single-layer LSTM over the sequence.
#   x:[N,D] bf16
#   w_ih:[D,8H] bf16, columns per-gate interleaved [i_f i_b | f_f f_b | g_f g_b | o_f o_b]
#   w_hh:[2H,8H] bf16, block structure: fwd h rows -> fwd slots, bwd rows -> bwd slots
#   b:[1,8H] f32 (per-direction b_ih+b_hh, same interleave)
#   out:[N,2H] bf16 (fwd in cols 0:H, bwd in H:2H)
# Gate order matches torch.nn.LSTM: i, f, g, o.
# ---------------------------------------------------------------------------
def _bilstm_kernel(x_ref, w_ih_ref, w_hh_ref, b_ref, out_ref, gx_sc):
    N = x_ref.shape[0]
    H2 = w_hh_ref.shape[0]          # 2 * hidden
    H = H2 // 2
    G = 4 * H2                      # 8 * hidden

    # Hoisted input projection for ALL timesteps & both directions: one
    # [N,D]x[D,8H] MXU matmul instead of N tiny per-step matmuls.
    # TODO(synk): for very long sequences store gx in bf16 / compute in
    # N-chunks to stay inside v7x's 64 MiB VMEM.
    gx_sc[...] = (jnp.dot(x_ref[...], w_ih_ref[...],
                          preferred_element_type=jnp.float32) + b_ref[...])

    # Column mask selecting the forward-direction half of every gate block.
    cols = lax.broadcasted_iota(jnp.int32, (1, G), 1)
    fwd_mask = (cols % H2) < H

    w_hh = w_hh_ref[...]            # loop-invariant bf16 [2H, 8H]

    CH = 8 if N % 8 == 0 else 1     # batched-store chunk (falls back to 1)
    n_chunks = N // CH

    def chunk(m, carry):
        h, c = carry                # [1, 2H] f32 each, vreg-resident carries
        base = m * CH
        rows_f, rows_b = [], []
        for k in range(CH):         # statically unrolled: LLO overlaps steps
            s = base + k
            tb = N - 1 - s
            # Single small recurrent matmul covering BOTH directions.
            rec = jnp.dot(h.astype(jnp.bfloat16), w_hh,
                          preferred_element_type=jnp.float32)      # [1, 8H]
            gf = gx_sc[pl.ds(s, 1), :]                             # fwd row
            gb = gx_sc[pl.ds(tb, 1), :]                            # bwd row
            g = jnp.where(fwd_mask, gf, gb) + rec
            # One cell evaluation over [1,2H]-wide slices = both directions.
            i_g = jax.nn.sigmoid(g[:, 0:H2])
            f_g = jax.nn.sigmoid(g[:, H2:2 * H2])
            g_g = jnp.tanh(g[:, 2 * H2:3 * H2])
            o_g = jax.nn.sigmoid(g[:, 3 * H2:4 * H2])
            c = f_g * c + i_g * g_g
            h = o_g * jnp.tanh(c)
            rows_f.append(h[:, 0:H])
            rows_b.append(h[:, H:H2])
        # Batched stores: one [CH,H] store per direction per chunk.
        out_ref[pl.ds(base, CH), 0:H] = (
            jnp.concatenate(rows_f, axis=0).astype(out_ref.dtype))
        out_ref[pl.ds(N - base - CH, CH), H:H2] = (
            jnp.concatenate(rows_b[::-1], axis=0).astype(out_ref.dtype))
        return (h, c)

    init = (jnp.zeros((1, H2), jnp.float32), jnp.zeros((1, H2), jnp.float32))
    lax.fori_loop(0, n_chunks, chunk, init)
    # TODO(synk): on v7x the fwd/bwd recurrences could be split across the two
    # TensorCores (grid=(2,) parallel); kept fused here for portability.


def bilstm_layer(x_bf16, w_ih, w_hh, b):
    N, D = x_bf16.shape
    H2 = w_hh.shape[0]
    G = w_ih.shape[1]
    return pl.pallas_call(
        _bilstm_kernel,
        out_shape=jax.ShapeDtypeStruct((N, H2), jnp.bfloat16),
        in_specs=[
            pl.BlockSpec((N, D), lambda: (0, 0)),
            pl.BlockSpec((D, G), lambda: (0, 0)),
            pl.BlockSpec((H2, G), lambda: (0, 0)),
            pl.BlockSpec((1, G), lambda: (0, 0)),
        ],
        out_specs=pl.BlockSpec((N, H2), lambda: (0, 0)),
        scratch_shapes=[pltpu.VMEM((N, G), jnp.float32)],
        compiler_params=pltpu.CompilerParams(vmem_limit_bytes=48 << 20),
    )(x_bf16, w_ih, w_hh, b)


# ---------------------------------------------------------------------------
# Pallas kernel 2: tiled pairwise MLP head with split first layer.
#   L:[N,F] = x @ W1[:2H] + b1     R:[N,F] = x @ W1[2H:]
#   pair (i,j): h1 = leaky(L[i] + R[j]); then (num_mlps-1) x (Linear+Leaky);
#   final Linear into the EXACT [P, R] output (no lane padding -> minimal HBM
#   writeback).  Grid tiles the i-row dimension; L is kept resident and sliced
#   in-kernel so the i-tile need not be a multiple of 8.
# ---------------------------------------------------------------------------
def _make_pair_mlp_kernel(num_extra, ti):
    def kernel(l_ref, r_ref, *refs):
        out_ref = refs[-1]
        w_refs = refs[:-1]
        N, F = r_ref.shape
        i = pl.program_id(0)
        start = pl.multiple_of(i * ti, ti)
        l = l_ref[pl.ds(start, ti), :]                             # [TI, F]

        l3 = lax.broadcast_in_dim(l, (ti, N, F), (0, 2))
        r3 = lax.broadcast_in_dim(r_ref[...], (ti, N, F), (1, 2))
        # Layer 1 (split-weight): elementwise in f32, then one cast to bf16.
        h = _leaky_relu((l3 + r3).reshape(ti * N, F)).astype(jnp.bfloat16)

        for li in range(num_extra):
            w = w_refs[2 * li][...]          # bf16 [F, F]
            b = w_refs[2 * li + 1][...]      # f32  [1, F]
            h = jnp.dot(h, w, preferred_element_type=jnp.float32) + b
            h = _leaky_relu(h).astype(jnp.bfloat16)

        wf = w_refs[-2][...]                 # bf16 [F, R]
        bf = w_refs[-1][...]                 # f32  [1, R]
        out_ref[...] = (jnp.dot(h, wf, preferred_element_type=jnp.float32)
                        + bf).astype(out_ref.dtype)
    return kernel


def _choose_tile_i(n, f, r):
    """Pick the i-tile from a VMEM budget (not a fixed row cap).

    Per-grid-step working set ~= double-buffered output tile (lane-padded)
    plus the layer-1 / activation intermediates.  Budget is conservative so it
    fits v7x's 64 MiB physical VMEM with headroom; prefers >= 2 grid steps so
    v7x's second TensorCore gets work."""
    budget = 20 * 1024 * 1024

    def step_bytes(t):
        rows = t * n
        out_b = rows * max(r, 128) * 4 * 2          # double-buffered out tile
        act_b = rows * max(f, 128) * 4 * 3          # pair-sum + act + bf16 copy
        return out_b + act_b

    divs = [t for t in range(1, n + 1)
            if n % t == 0 and ((t * n) % 8 == 0 or t == n)]
    fit = [t for t in divs if step_bytes(t) <= budget]
    if not fit:
        # TODO(synk): tile the j dimension too for very long sequences.
        return min(divs)
    multi = [t for t in fit if n // t >= 2]
    return max(multi) if multi else max(fit)


def pair_mlp(x, lw, rw, b1, extra, wf, bf_bias):
    N, H2 = x.shape                      # H2 = 2*hidden
    F = lw.shape[1]
    R = wf.shape[1]
    num_extra = len(extra)
    P = N * N

    # Split-weight layer-1 precompute (tiny [N,2H]x[2H,F] matmuls; JAX glue).
    L = jnp.dot(x, lw, preferred_element_type=jnp.float32) + b1   # [N, F]
    Rm = jnp.dot(x, rw, preferred_element_type=jnp.float32)       # [N, F]

    TI = _choose_tile_i(N, F, R)
    grid = (N // TI,)

    flat = [L, Rm]
    in_specs = [pl.BlockSpec((N, F), lambda i: (0, 0)),
                pl.BlockSpec((N, F), lambda i: (0, 0))]
    for (w, b) in extra:
        flat += [w, b]
        in_specs += [pl.BlockSpec(w.shape, lambda i: (0, 0)),
                     pl.BlockSpec(b.shape, lambda i: (0, 0))]
    flat += [wf, bf_bias]
    in_specs += [pl.BlockSpec(wf.shape, lambda i: (0, 0)),
                 pl.BlockSpec(bf_bias.shape, lambda i: (0, 0))]

    flops = int(2 * P * F * (F * num_extra + R) + 2 * P * F)
    bytes_accessed = int(2 * N * F * 4
                         + num_extra * (F * F * 2 + F * 4)
                         + F * R * 2 + R * 4
                         + P * R * 4)

    return pl.pallas_call(
        _make_pair_mlp_kernel(num_extra, TI),
        out_shape=jax.ShapeDtypeStruct((P, R), jnp.float32),
        grid=grid,
        in_specs=in_specs,
        out_specs=pl.BlockSpec((TI * N, R), lambda i: (i, 0)),
        compiler_params=pltpu.CompilerParams(
            dimension_semantics=("parallel",),
            vmem_limit_bytes=48 << 20),
        cost_estimate=pl.CostEstimate(flops=flops, transcendentals=0,
                                      bytes_accessed=bytes_accessed),
    )(*flat)


# ---------------------------------------------------------------------------
# One-time parameter preparation (hoisted out of the jitted forward): gate
# interleaving, block-diagonal W_hh, bf16 casts, split first pair-MLP layer.
# ---------------------------------------------------------------------------
def _interleave_gates(w_f, w_b, H):
    parts = []
    for q in range(4):
        parts.append(w_f[..., q * H:(q + 1) * H])
        parts.append(w_b[..., q * H:(q + 1) * H])
    return jnp.concatenate(parts, axis=-1)


def prepare_params(params):
    prepped = {"token_embedding": params["token_embedding"],
               "word_type_embedding": params["word_type_embedding"]}

    lstm = []
    for layer in params["lstm_layers"]:
        H = layer["fwd_w_hh"].shape[0]
        w_ih = _interleave_gates(layer["fwd_w_ih"], layer["bwd_w_ih"], H)
        b = _interleave_gates(layer["fwd_b"], layer["bwd_b"], H)
        w_hh = jnp.zeros((2 * H, 8 * H), jnp.float32)
        for q in range(4):
            w_hh = w_hh.at[0:H, q * 2 * H:q * 2 * H + H].set(
                layer["fwd_w_hh"][:, q * H:(q + 1) * H])
            w_hh = w_hh.at[H:2 * H, q * 2 * H + H:(q + 1) * 2 * H].set(
                layer["bwd_w_hh"][:, q * H:(q + 1) * H])
        lstm.append({"w_ih": w_ih.astype(jnp.bfloat16),
                     "w_hh": w_hh.astype(jnp.bfloat16),
                     "b": b.astype(jnp.float32)})
    prepped["lstm_layers"] = lstm

    H2 = 2 * params["lstm_layers"][-1]["fwd_w_hh"].shape[0]
    w1, b1 = params["fcs"][0]
    prepped["pair_l_w"] = w1[:H2, :]
    prepped["pair_r_w"] = w1[H2:, :]
    prepped["pair_b1"] = b1
    prepped["pair_extra"] = [(w.astype(jnp.bfloat16), b)
                             for (w, b) in params["fcs"][1:]]
    prepped["fc_final_w"] = params["fc_final_w"].astype(jnp.bfloat16)
    prepped["fc_final_b"] = params["fc_final_b"]
    return prepped


# ---------------------------------------------------------------------------
# Full forward pass (glue in plain JAX, hot paths in the Pallas kernels).
# ---------------------------------------------------------------------------
def edee_forward(prepped, word_ids, wType_ids):
    tok = prepped["token_embedding"][word_ids]          # [N, Dw] (frozen embed)
    typ = prepped["word_type_embedding"][wType_ids]     # [N, Dt]
    x = jnp.concatenate([tok, typ], axis=1).astype(jnp.bfloat16)
    # dropout -> identity (inference semantics)

    for layer in prepped["lstm_layers"]:
        x = bilstm_layer(x, layer["w_ih"], layer["w_hh"], layer["b"])  # [N,2H] bf16

    # itertools.product(rows, repeat=2): pair p = i*N + j -> cat(row_i, row_j);
    # handled implicitly inside pair_mlp via the split-weight trick.
    return pair_mlp(x, prepped["pair_l_w"], prepped["pair_r_w"],
                    prepped["pair_b1"], prepped["pair_extra"],
                    prepped["fc_final_w"], prepped["fc_final_b"])


# ---------------------------------------------------------------------------
# Deterministic parameter construction (synthetic, no checkpoint loading).
# Weight layout is [in, out] (transposed vs torch's [out, in]); per-direction
# LSTM bias represents b_ih + b_hh.
# ---------------------------------------------------------------------------
def init_params(key, *, vocab, word_dim, word_type_tag_num, word_type_dim,
                hidden, num_layers, final_hidden, num_mlps, role_num):
    def nrm(k, shape, scale=0.1):
        return scale * jax.random.normal(k, shape, dtype=jnp.float32)

    keys = iter(jax.random.split(key, 64))
    params = {
        "token_embedding": nrm(next(keys), (vocab, word_dim)),
        "word_type_embedding": nrm(next(keys), (word_type_tag_num, word_type_dim)),
    }
    in_dim = word_dim + word_type_dim
    layers = []
    for l in range(num_layers):
        d = in_dim if l == 0 else 2 * hidden
        layers.append({
            "fwd_w_ih": nrm(next(keys), (d, 4 * hidden)),
            "fwd_w_hh": nrm(next(keys), (hidden, 4 * hidden)),
            "fwd_b":    nrm(next(keys), (1, 4 * hidden)),
            "bwd_w_ih": nrm(next(keys), (d, 4 * hidden)),
            "bwd_w_hh": nrm(next(keys), (hidden, 4 * hidden)),
            "bwd_b":    nrm(next(keys), (1, 4 * hidden)),
        })
    params["lstm_layers"] = layers

    fcs = []
    last = 4 * hidden
    for _ in range(num_mlps):
        fcs.append((nrm(next(keys), (last, final_hidden)),
                    nrm(next(keys), (1, final_hidden))))
        last = final_hidden
    params["fcs"] = fcs
    params["fc_final_w"] = nrm(next(keys), (final_hidden, role_num))
    params["fc_final_b"] = nrm(next(keys), (1, role_num))
    return params


if __name__ == "__main__":
    # Small synthetic "args"
    SEQ = 8                     # number of tokens N
    VOCAB = 50
    WORD_DIM = 48               # args.word_embedding_dim
    WORD_TYPE_TAG_NUM = 10
    WORD_TYPE_DIM = 16          # args.word_type_embedding_dim
    HIDDEN = 32                 # args.hidden_size
    NUM_LAYERS = 1              # args.num_layers
    FINAL_HIDDEN = 64           # args.final_hidden_size
    NUM_MLPS = 2                # args.num_mlps
    ROLE_NUM = 8                # args.role_role_num

    key = jax.random.PRNGKey(0)
    kp, kw, kt = jax.random.split(key, 3)
    params = init_params(kp, vocab=VOCAB, word_dim=WORD_DIM,
                         word_type_tag_num=WORD_TYPE_TAG_NUM,
                         word_type_dim=WORD_TYPE_DIM, hidden=HIDDEN,
                         num_layers=NUM_LAYERS, final_hidden=FINAL_HIDDEN,
                         num_mlps=NUM_MLPS, role_num=ROLE_NUM)

    # One-time weight repacking, hoisted out of the jitted forward.
    prepped = prepare_params(params)
    prepped = jax.tree_util.tree_map(jax.block_until_ready, prepped)

    word_ids = jax.random.randint(kw, (SEQ,), 0, VOCAB)
    wType_ids = jax.random.randint(kt, (SEQ,), 0, WORD_TYPE_TAG_NUM)

    fwd = jax.jit(edee_forward)
    logits = fwd(prepped, word_ids, wType_ids)
    jax.block_until_ready(logits)
    assert logits.shape == (SEQ * SEQ, ROLE_NUM), logits.shape
    assert bool(jnp.all(jnp.isfinite(logits)))
    print("KERNEL_OK")
</pallas_src>

<mosaic_0001>
module attributes {stable_mosaic.version = 11 : i64} {
  func.func @kernel(%arg0: i32, %arg1: memref<8x64xf32, #tpu.memory_space<vmem>>, %arg2: memref<8x64xf32, #tpu.memory_space<vmem>>, %arg3: memref<64x64xbf16, #tpu.memory_space<vmem>>, %arg4: memref<1x64xf32, #tpu.memory_space<vmem>>, %arg5: memref<64x8xbf16, #tpu.memory_space<vmem>>, %arg6: memref<1x8xf32, #tpu.memory_space<vmem>>, %arg7: memref<32x8xf32, #tpu.memory_space<vmem>>) attributes {dimension_semantics = [#tpu.dimension_semantics<parallel>], iteration_bounds = array<i64: 2>, scalar_prefetch = 0 : i64, scratch_operands = 0 : i64, tpu.core_type = #tpu.core_type<tc>, window_params = [{pipeline_mode = #tpu.pipeline_mode<synchronous>, transform_indices = @transform_0, window_bounds = array<i64: 8, 64>}, {pipeline_mode = #tpu.pipeline_mode<synchronous>, transform_indices = @transform_1, window_bounds = array<i64: 8, 64>}, {pipeline_mode = #tpu.pipeline_mode<synchronous>, transform_indices = @transform_2, window_bounds = array<i64: 64, 64>}, {pipeline_mode = #tpu.pipeline_mode<synchronous>, transform_indices = @transform_3, window_bounds = array<i64: 1, 64>}, {pipeline_mode = #tpu.pipeline_mode<synchronous>, transform_indices = @transform_4, window_bounds = array<i64: 64, 8>}, {pipeline_mode = #tpu.pipeline_mode<synchronous>, transform_indices = @transform_5, window_bounds = array<i64: 1, 8>}, {transform_indices = @transform_6, window_bounds = array<i64: 32, 8>}]} {
    %c4_i32 = arith.constant 4 : i32
    %0 = arith.muli %arg0, %c4_i32 : i32
    %1 = tpu.assume_multiple %0, 4 : i32
    %2 = arith.index_cast %1 : i32 to index
    %c0 = arith.constant 0 : index
    %3 = vector.load %arg1[%2, %c0] : memref<8x64xf32, #tpu.memory_space<vmem>>, vector<4x64xf32>
    %4 = vector.shape_cast %3 : vector<4x64xf32> to vector<4x1x64xf32>
    %5 = vector.broadcast %4 : vector<4x1x64xf32> to vector<4x8x64xf32>
    %c0_0 = arith.constant 0 : index
    %c0_1 = arith.constant 0 : index
    %6 = vector.load %arg2[%c0_0, %c0_1] : memref<8x64xf32, #tpu.memory_space<vmem>>, vector<8x64xf32>
    %7 = vector.shape_cast %6 : vector<8x64xf32> to vector<1x8x64xf32>
    %8 = vector.broadcast %7 : vector<1x8x64xf32> to vector<4x8x64xf32>
    %9 = arith.addf %5, %8 : vector<4x8x64xf32>
    %10 = vector.shape_cast %9 : vector<4x8x64xf32> to vector<32x64xf32>
    %cst = arith.constant 0.000000e+00 : f32
    %11 = vector.broadcast %cst : f32 to vector<32x64xf32>
    %12 = arith.cmpf ogt, %10, %11 : vector<32x64xf32>
    %cst_2 = arith.constant 0.00999999977 : f32
    %13 = vector.broadcast %cst_2 : f32 to vector<32x64xf32>
    %14 = arith.mulf %13, %10 : vector<32x64xf32>
    %15 = arith.select %12, %10, %14 : vector<32x64xi1>, vector<32x64xf32>
    %16 = arith.truncf %15 : vector<32x64xf32> to vector<32x64xbf16>
    %c0_3 = arith.constant 0 : index
    %c0_4 = arith.constant 0 : index
    %17 = vector.load %arg3[%c0_3, %c0_4] : memref<64x64xbf16, #tpu.memory_space<vmem>>, vector<64x64xbf16>
    %c0_5 = arith.constant 0 : index
    %c0_6 = arith.constant 0 : index
    %18 = vector.load %arg4[%c0_5, %c0_6] : memref<1x64xf32, #tpu.memory_space<vmem>>, vector<1x64xf32>
    %cst_7 = arith.constant dense<0.000000e+00> : vector<32x64xf32>
    %19 = tpu.matmul %16, %17, %cst_7 {dimension_numbers = #tpu.dot_dimension_numbers<[1], [0], [0], [1], [0, 0, 1, 1], [], []>} : vector<32x64xbf16>, vector<64x64xbf16>, vector<32x64xf32> -> vector<32x64xf32>
    %20 = vector.broadcast %18 : vector<1x64xf32> to vector<32x64xf32>
    %21 = arith.addf %19, %20 : vector<32x64xf32>
    %cst_8 = arith.constant 0.000000e+00 : f32
    %22 = vector.broadcast %cst_8 : f32 to vector<32x64xf32>
    %23 = arith.cmpf ogt, %21, %22 : vector<32x64xf32>
    %cst_9 = arith.constant 0.00999999977 : f32
    %24 = vector.broadcast %cst_9 : f32 to vector<32x64xf32>
    %25 = arith.mulf %24, %21 : vector<32x64xf32>
    %26 = arith.select %23, %21, %25 : vector<32x64xi1>, vector<32x64xf32>
    %27 = arith.truncf %26 : vector<32x64xf32> to vector<32x64xbf16>
    %c0_10 = arith.constant 0 : index
    %c0_11 = arith.constant 0 : index
    %28 = vector.load %arg5[%c0_10, %c0_11] : memref<64x8xbf16, #tpu.memory_space<vmem>>, vector<64x8xbf16>
    %c0_12 = arith.constant 0 : index
    %c0_13 = arith.constant 0 : index
    %29 = vector.load %arg6[%c0_12, %c0_13] : memref<1x8xf32, #tpu.memory_space<vmem>>, vector<1x8xf32>
    %cst_14 = arith.constant dense<0.000000e+00> : vector<32x8xf32>
    %30 = tpu.matmul %27, %28, %cst_14 {dimension_numbers = #tpu.dot_dimension_numbers<[1], [0], [0], [1], [0, 0, 1, 1], [], []>} : vector<32x64xbf16>, vector<64x8xbf16>, vector<32x8xf32> -> vector<32x8xf32>
    %31 = vector.broadcast %29 : vector<1x8xf32> to vector<32x8xf32>
    %32 = arith.addf %30, %31 : vector<32x8xf32>
    %c0_15 = arith.constant 0 : index
    %c0_16 = arith.constant 0 : index
    %33 = vector.load %arg7[%c0_15, %c0_16] : memref<32x8xf32, #tpu.memory_space<vmem>>, vector<32x8xf32>
    tpu.vector_store %arg7[%c0_15, %c0_16], %32 {strides = array<i32>} : memref<32x8xf32, #tpu.memory_space<vmem>>, vector<32x8xf32>,
    return
  }
  func.func @transform_0(%arg0: i32) -> (i32, i32) {
    %c0_i32 = arith.constant 0 : i32
    %c0_i32_0 = arith.constant 0 : i32
    %c0_i32_1 = arith.constant 0 : i32
    return %c0_i32, %c0_i32_0 : i32, i32
  }
  func.func @transform_1(%arg0: i32) -> (i32, i32) {
    %c0_i32 = arith.constant 0 : i32
    %c0_i32_0 = arith.constant 0 : i32
    %c0_i32_1 = arith.constant 0 : i32
    return %c0_i32, %c0_i32_0 : i32, i32
  }
  func.func @transform_2(%arg0: i32) -> (i32, i32) {
    %c0_i32 = arith.constant 0 : i32
    %c0_i32_0 = arith.constant 0 : i32
    %c0_i32_1 = arith.constant 0 : i32
    return %c0_i32, %c0_i32_0 : i32, i32
  }
  func.func @transform_3(%arg0: i32) -> (i32, i32) {
    %c0_i32 = arith.constant 0 : i32
    %c0_i32_0 = arith.constant 0 : i32
    %c0_i32_1 = arith.constant 0 : i32
    return %c0_i32, %c0_i32_0 : i32, i32
  }
  func.func @transform_4(%arg0: i32) -> (i32, i32) {
    %c0_i32 = arith.constant 0 : i32
    %c0_i32_0 = arith.constant 0 : i32
    %c0_i32_1 = arith.constant 0 : i32
    return %c0_i32, %c0_i32_0 : i32, i32
  }
  func.func @transform_5(%arg0: i32) -> (i32, i32) {
    %c0_i32 = arith.constant 0 : i32
    %c0_i32_0 = arith.constant 0 : i32
    %c0_i32_1 = arith.constant 0 : i32
    return %c0_i32, %c0_i32_0 : i32, i32
  }
  func.func @transform_6(%arg0: i32) -> (i32, i32) {
    %c0_i32 = arith.constant 0 : i32
    %c0_i32_0 = arith.constant 0 : i32
    return %arg0, %c0_i32 : i32, i32
  }
}

module attributes {stable_mosaic.version = 11 : i64} {
  func.func @_bilstm_kernel(%arg0: memref<8x64xbf16, #tpu.memory_space<vmem>>, %arg1: memref<64x256xbf16, #tpu.memory_space<vmem>>, %arg2: memref<64x256xbf16, #tpu.memory_space<vmem>>, %arg3: memref<1x256xf32, #tpu.memory_space<vmem>>, %arg4: memref<8x64xbf16, #tpu.memory_space<vmem>>, %arg5: memref<8x256xf32, #tpu.memory_space<vmem>>) attributes {dimension_semantics = [], scalar_prefetch = 0 : i64, scratch_operands = 1 : i64, tpu.core_type = #tpu.core_type<tc>} {
    %c0 = arith.constant 0 : index
    %c0_0 = arith.constant 0 : index
    %0 = vector.load %arg0[%c0, %c0_0] : memref<8x64xbf16, #tpu.memory_space<vmem>>, vector<8x64xbf16>
    %c0_1 = arith.constant 0 : index
    %c0_2 = arith.constant 0 : index
    %1 = vector.load %arg1[%c0_1, %c0_2] : memref<64x256xbf16, #tpu.memory_space<vmem>>, vector<64x256xbf16>
    %cst = arith.constant dense<0.000000e+00> : vector<8x256xf32>
    %2 = tpu.matmul %0, %1, %cst {dimension_numbers = #tpu.dot_dimension_numbers<[1], [0], [0], [1], [0, 0, 1, 1], [], []>} : vector<8x64xbf16>, vector<64x256xbf16>, vector<8x256xf32> -> vector<8x256xf32>
    %c0_3 = arith.constant 0 : index
    %c0_4 = arith.constant 0 : index
    %3 = vector.load %arg3[%c0_3, %c0_4] : memref<1x256xf32, #tpu.memory_space<vmem>>, vector<1x256xf32>
    %4 = vector.broadcast %3 : vector<1x256xf32> to vector<8x256xf32>
    %5 = arith.addf %2, %4 : vector<8x256xf32>
    %c0_5 = arith.constant 0 : index
    %c0_6 = arith.constant 0 : index
    %6 = vector.load %arg5[%c0_5, %c0_6] : memref<8x256xf32, #tpu.memory_space<vmem>>, vector<8x256xf32>
    tpu.vector_store %arg5[%c0_5, %c0_6], %5 {strides = array<i32>} : memref<8x256xf32, #tpu.memory_space<vmem>>, vector<8x256xf32>,
    %7 = tpu.iota {dimensions = array<i32: 1>} : vector<1x256xi32>
    %c64_i32 = arith.constant 64 : i32
    %c0_i32 = arith.constant 0 : i32
    %8 = arith.cmpi eq, %c64_i32, %c0_i32 : i32
    %c1_i32 = arith.constant 1 : i32
    %9 = arith.select %8, %c1_i32, %c64_i32 : i32
    %10 = vector.broadcast %9 : i32 to vector<1x256xi32>
    %11 = arith.remsi %7, %10 : vector<1x256xi32>
    %c0_i32_7 = arith.constant 0 : i32
    %12 = vector.broadcast %c0_i32_7 : i32 to vector<1x256xi32>
    %13 = arith.cmpi ne, %11, %12 : vector<1x256xi32>
    %c0_i32_8 = arith.constant 0 : i32
    %14 = vector.broadcast %c0_i32_8 : i32 to vector<1x256xi32>
    %15 = arith.cmpi slt, %11, %14 : vector<1x256xi32>
    %c0_i32_9 = arith.constant 0 : i32
    %16 = arith.cmpi slt, %9, %c0_i32_9 : i32
    %17 = vector.broadcast %16 : i1 to vector<1x256xi1>
    %18 = vector.broadcast %17 : vector<1x256xi1> to vector<1x256xi1>
    %19 = arith.xori %15, %18 : vector<1x256xi1>
    %20 = arith.andi %19, %13 : vector<1x256xi1>
    %21 = vector.broadcast %9 : i32 to vector<1x256xi32>
    %22 = arith.addi %11, %21 : vector<1x256xi32>
    %23 = arith.select %20, %22, %11 : vector<1x256xi1>, vector<1x256xi32>
    %c32_i32 = arith.constant 32 : i32
    %24 = vector.broadcast %c32_i32 : i32 to vector<1x256xi32>
    %25 = arith.cmpi slt, %23, %24 : vector<1x256xi32>
    %c0_10 = arith.constant 0 : index
    %c0_11 = arith.constant 0 : index
    %26 = vector.load %arg2[%c0_10, %c0_11] : memref<64x256xbf16, #tpu.memory_space<vmem>>, vector<64x256xbf16>
    %cst_12 = arith.constant 0.000000e+00 : f32
    %27 = vector.broadcast %cst_12 : f32 to vector<1x64xf32>
    %cst_13 = arith.constant 0.000000e+00 : f32
    %28 = vector.broadcast %cst_13 : f32 to vector<1x64xf32>
    %c0_i32_14 = arith.constant 0 : i32
    %c8_i32 = arith.constant 8 : i32
    %29 = arith.muli %c0_i32_14, %c8_i32 : i32
    %c0_i32_15 = arith.constant 0 : i32
    %30 = arith.addi %29, %c0_i32_15 : i32
    %c7_i32 = arith.constant 7 : i32
    %31 = arith.subi %c7_i32, %30 : i32
    %32 = arith.truncf %27 : vector<1x64xf32> to vector<1x64xbf16>
    %cst_16 = arith.constant dense<0.000000e+00> : vector<1x256xf32>
    %33 = tpu.matmul %32, %26, %cst_16 {dimension_numbers = #tpu.dot_dimension_numbers<[1], [0], [0], [1], [0, 0, 1, 1], [], []>} : vector<1x64xbf16>, vector<64x256xbf16>, vector<1x256xf32> -> vector<1x256xf32>
    %34 = arith.index_cast %30 : i32 to index
    %c0_17 = arith.constant 0 : index
    %35 = vector.load %arg5[%34, %c0_17] : memref<8x256xf32, #tpu.memory_space<vmem>>, vector<1x256xf32>
    %36 = arith.index_cast %31 : i32 to index
    %c0_18 = arith.constant 0 : index
    %37 = vector.load %arg5[%36, %c0_18] : memref<8x256xf32, #tpu.memory_space<vmem>>, vector<1x256xf32>
    %38 = arith.select %25, %35, %37 : vector<1x256xi1>, vector<1x256xf32>
    %39 = arith.addf %38, %33 : vector<1x256xf32>
    %40 = vector.extract_strided_slice %39 {offsets = [0, 0], sizes = [1, 64], strides = [1, 1]} : vector<1x256xf32> to vector<1x64xf32>
    %41 = arith.negf %40 : vector<1x64xf32>
    %42 = math.exp %41 : vector<1x64xf32>
    %cst_19 = arith.constant 1.000000e+00 : f32
    %43 = vector.broadcast %cst_19 : f32 to vector<1x64xf32>
    %44 = arith.addf %43, %42 : vector<1x64xf32>
    %45 = arith.divf %43, %44 : vector<1x64xf32>
    %46 = vector.extract_strided_slice %39 {offsets = [0, 64], sizes = [1, 64], strides = [1, 1]} : vector<1x256xf32> to vector<1x64xf32>
    %47 = arith.negf %46 : vector<1x64xf32>
    %48 = math.exp %47 : vector<1x64xf32>
    %cst_20 = arith.constant 1.000000e+00 : f32
    %49 = vector.broadcast %cst_20 : f32 to vector<1x64xf32>
    %50 = arith.addf %49, %48 : vector<1x64xf32>
    %51 = arith.divf %49, %50 : vector<1x64xf32>
    %52 = vector.extract_strided_slice %39 {offsets = [0, 128], sizes = [1, 64], strides = [1, 1]} : vector<1x256xf32> to vector<1x64xf32>
    %53 = math.tanh %52 : vector<1x64xf32>
    %54 = vector.extract_strided_slice %39 {offsets = [0, 192], sizes = [1, 64], strides = [1, 1]} : vector<1x256xf32> to vector<1x64xf32>
    %55 = arith.negf %54 : vector<1x64xf32>
    %56 = math.exp %55 : vector<1x64xf32>
    %cst_21 = arith.constant 1.000000e+00 : f32
    %57 = vector.broadcast %cst_21 : f32 to vector<1x64xf32>
    %58 = arith.addf %57, %56 : vector<1x64xf32>
    %59 = arith.divf %57, %58 : vector<1x64xf32>
    %60 = arith.mulf %51, %28 : vector<1x64xf32>
    %61 = arith.mulf %45, %53 : vector<1x64xf32>
    %62 = arith.addf %60, %61 : vector<1x64xf32>
    %63 = math.tanh %62 : vector<1x64xf32>
    %64 = arith.mulf %59, %63 : vector<1x64xf32>
    %65 = vector.extract_strided_slice %64 {offsets = [0, 0], sizes = [1, 32], strides = [1, 1]} : vector<1x64xf32> to vector<1x32xf32>
    %66 = vector.extract_strided_slice %64 {offsets = [0, 32], sizes = [1, 32], strides = [1, 1]} : vector<1x64xf32> to vector<1x32xf32>
    %c1_i32_22 = arith.constant 1 : i32
    %67 = arith.addi %29, %c1_i32_22 : i32
    %c7_i32_23 = arith.constant 7 : i32
    %68 = arith.subi %c7_i32_23, %67 : i32
    %69 = arith.truncf %64 : vector<1x64xf32> to vector<1x64xbf16>
    %cst_24 = arith.constant dense<0.000000e+00> : vector<1x256xf32>
    %70 = tpu.matmul %69, %26, %cst_24 {dimension_numbers = #tpu.dot_dimension_numbers<[1], [0], [0], [1], [0, 0, 1, 1], [], []>} : vector<1x64xbf16>, vector<64x256xbf16>, vector<1x256xf32> -> vector<1x256xf32>
    %71 = arith.index_cast %67 : i32 to index
    %c0_25 = arith.constant 0 : index
    %72 = vector.load %arg5[%71, %c0_25] : memref<8x256xf32, #tpu.memory_space<vmem>>, vector<1x256xf32>
    %73 = arith.index_cast %68 : i32 to index
    %c0_26 = arith.constant 0 : index
    %74 = vector.load %arg5[%73, %c0_26] : memref<8x256xf32, #tpu.memory_space<vmem>>, vector<1x256xf32>
    %75 = arith.select %25, %72, %74 : vector<1x256xi1>, vector<1x256xf32>
    %76 = arith.addf %75, %70 : vector<1x256xf32>
    %77 = vector.extract_strided_slice %76 {offsets = [0, 0], sizes = [1, 64], strides = [1, 1]} : vector<1x256xf32> to vector<1x64xf32>
    %78 = arith.negf %77 : vector<1x64xf32>
    %79 = math.exp %78 : vector<1x64xf32>
    %cst_27 = arith.constant 1.000000e+00 : f32
    %80 = vector.broadcast %cst_27 : f32 to vector<1x64xf32>
    %81 = arith.addf %80, %79 : vector<1x64xf32>
    %82 = arith.divf %80, %81 : vector<1x64xf32>
    %83 = vector.extract_strided_slice %76 {offsets = [0, 64], sizes = [1, 64], strides = [1, 1]} : vector<1x256xf32> to vector<1x64xf32>
    %84 = arith.negf %83 : vector<1x64xf32>
    %85 = math.exp %84 : vector<1x64xf32>
    %cst_28 = arith.constant 1.000000e+00 : f32
    %86 = vector.broadcast %cst_28 : f32 to vector<1x64xf32>
    %87 = arith.addf %86, %85 : vector<1x64xf32>
    %88 = arith.divf %86, %87 : vector<1x64xf32>
    %89 = vector.extract_strided_slice %76 {offsets = [0, 128], sizes = [1, 64], strides = [1, 1]} : vector<1x256xf32> to vector<1x64xf32>
    %90 = math.tanh %89 : vector<1x64xf32>
    %91 = vector.extract_strided_slice %76 {offsets = [0, 192], sizes = [1, 64], strides = [1, 1]} : vector<1x256xf32> to vector<1x64xf32>
    %92 = arith.negf %91 : vector<1x64xf32>
    %93 = math.exp %92 : vector<1x64xf32>
    %cst_29 = arith.constant 1.000000e+00 : f32
    %94 = vector.broadcast %cst_29 : f32 to vector<1x64xf32>
    %95 = arith.addf %94, %93 : vector<1x64xf32>
    %96 = arith.divf %94, %95 : vector<1x64xf32>
    %97 = arith.mulf %88, %62 : vector<1x64xf32>
    %98 = arith.mulf %82, %90 : vector<1x64xf32>
    %99 = arith.addf %97, %98 : vector<1x64xf32>
    %100 = math.tanh %99 : vector<1x64xf32>
    %101 = arith.mulf %96, %100 : vector<1x64xf32>
    %102 = vector.extract_strided_slice %101 {offsets = [0, 0], sizes = [1, 32], strides = [1, 1]} : vector<1x64xf32> to vector<1x32xf32>
    %103 = vector.extract_strided_slice %101 {offsets = [0, 32], sizes = [1, 32], strides = [1, 1]} : vector<1x64xf32> to vector<1x32xf32>
    %c2_i32 = arith.constant 2 : i32
    %104 = arith.addi %29, %c2_i32 : i32
    %c7_i32_30 = arith.constant 7 : i32
    %105 = arith.subi %c7_i32_30, %104 : i32
    %106 = arith.truncf %101 : vector<1x64xf32> to vector<1x64xbf16>
    %cst_31 = arith.constant dense<0.000000e+00> : vector<1x256xf32>
    %107 = tpu.matmul %106, %26, %cst_31 {dimension_numbers = #tpu.dot_dimension_numbers<[1], [0], [0], [1], [0, 0, 1, 1], [], []>} : vector<1x64xbf16>, vector<64x256xbf16>, vector<1x256xf32> -> vector<1x256xf32>
    %108 = arith.index_cast %104 : i32 to index
    %c0_32 = arith.constant 0 : index
    %109 = vector.load %arg5[%108, %c0_32] : memref<8x256xf32, #tpu.memory_space<vmem>>, vector<1x256xf32>
    %110 = arith.index_cast %105 : i32 to index
    %c0_33 = arith.constant 0 : index
    %111 = vector.load %arg5[%110, %c0_33] : memref<8x256xf32, #tpu.memory_space<vmem>>, vector<1x256xf32>
    %112 = arith.select %25, %109, %111 : vector<1x256xi1>, vector<1x256xf32>
    %113 = arith.addf %112, %107 : vector<1x256xf32>
    %114 = vector.extract_strided_slice %113 {offsets = [0, 0], sizes = [1, 64], strides = [1, 1]} : vector<1x256xf32> to vector<1x64xf32>
    %115 = arith.negf %114 : vector<1x64xf32>
    %116 = math.exp %115 : vector<1x64xf32>
    %cst_34 = arith.constant 1.000000e+00 : f32
    %117 = vector.broadcast %cst_34 : f32 to vector<1x64xf32>
    %118 = arith.addf %117, %116 : vector<1x64xf32>
    %119 = arith.divf %117, %118 : vector<1x64xf32>
    %120 = vector.extract_strided_slice %113 {offsets = [0, 64], sizes = [1, 64], strides = [1, 1]} : vector<1x256xf32> to vector<1x64xf32>
    %121 = arith.negf %120 : vector<1x64xf32>
    %122 = math.exp %121 : vector<1x64xf32>
    %cst_35 = arith.constant 1.000000e+00 : f32
    %123 = vector.broadcast %cst_35 : f32 to vector<1x64xf32>
    %124 = arith.addf %123, %122 : vector<1x64xf32>
    %125 = arith.divf %123, %124 : vector<1x64xf32>
    %126 = vector.extract_strided_slice %113 {offsets = [0, 128], sizes = [1, 64], strides = [1, 1]} : vector<1x256xf32> to vector<1x64xf32>
    %127 = math.tanh %126 : vector<1x64xf32>
    %128 = vector.extract_strided_slice %113 {offsets = [0, 192], sizes = [1, 64], strides = [1, 1]} : vector<1x256xf32> to vector<1x64xf32>
    %129 = arith.negf %128 : vector<1x64xf32>
    %130 = math.exp %129 : vector<1x64xf32>
    %cst_36 = arith.constant 1.000000e+00 : f32
    %131 = vector.broadcast %cst_36 : f32 to vector<1x64xf32>
    %132 = arith.addf %131, %130 : vector<1x64xf32>
    %133 = arith.divf %131, %132 : vector<1x64xf32>
    %134 = arith.mulf %125, %99 : vector<1x64xf32>
    %135 = arith.mulf %119, %127 : vector<1x64xf32>
    %136 = arith.addf %134, %135 : vector<1x64xf32>
    %137 = math.tanh %136 : vector<1x64xf32>
    %138 = arith.mulf %133, %137 : vector<1x64xf32>
    %139 = vector.extract_strided_slice %138 {offsets = [0, 0], sizes = [1, 32], strides = [1, 1]} : vector<1x64xf32> to vector<1x32xf32>
    %140 = vector.extract_strided_slice %138 {offsets = [0, 32], sizes = [1, 32], strides = [1, 1]} : vector<1x64xf32> to vector<1x32xf32>
    %c3_i32 = arith.constant 3 : i32
    %141 = arith.addi %29, %c3_i32 : i32
    %c7_i32_37 = arith.constant 7 : i32
    %142 = arith.subi %c7_i32_37, %141 : i32
    %143 = arith.truncf %138 : vector<1x64xf32> to vector<1x64xbf16>
    %cst_38 = arith.constant dense<0.000000e+00> : vector<1x256xf32>
    %144 = tpu.matmul %143, %26, %cst_38 {dimension_numbers = #tpu.dot_dimension_numbers<[1], [0], [0], [1], [0, 0, 1, 1], [], []>} : vector<1x64xbf16>, vector<64x256xbf16>, vector<1x256xf32> -> vector<1x256xf32>
    %145 = arith.index_cast %141 : i32 to index
    %c0_39 = arith.constant 0 : index
    %146 = vector.load %arg5[%145, %c0_39] : memref<8x256xf32, #tpu.memory_space<vmem>>, vector<1x256xf32>
    %147 = arith.index_cast %142 : i32 to index
    %c0_40 = arith.constant 0 : index
    %148 = vector.load %arg5[%147, %c0_40] : memref<8x256xf32, #tpu.memory_space<vmem>>, vector<1x256xf32>
    %149 = arith.select %25, %146, %148 : vector<1x256xi1>, vector<1x256xf32>
    %150 = arith.addf %149, %144 : vector<1x256xf32>
    %151 = vector.extract_strided_slice %150 {offsets = [0, 0], sizes = [1, 64], strides = [1, 1]} : vector<1x256xf32> to vector<1x64xf32>
    %152 = arith.negf %151 : vector<1x64xf32>
    %153 = math.exp %152 : vector<1x64xf32>
    %cst_41 = arith.constant 1.000000e+00 : f32
    %154 = vector.broadcast %cst_41 : f32 to vector<1x64xf32>
    %155 = arith.addf %154, %153 : vector<1x64xf32>
    %156 = arith.divf %154, %155 : vector<1x64xf32>
    %157 = vector.extract_strided_slice %150 {offsets = [0, 64], sizes = [1, 64], strides = [1, 1]} : vector<1x256xf32> to vector<1x64xf32>
    %158 = arith.negf %157 : vector<1x64xf32>
    %159 = math.exp %158 : vector<1x64xf32>
    %cst_42 = arith.constant 1.000000e+00 : f32
    %160 = vector.broadcast %cst_42 : f32 to vector<1x64xf32>
    %161 = arith.addf %160, %159 : vector<1x64xf32>
    %162 = arith.divf %160, %161 : vector<1x64xf32>
    %163 = vector.extract_strided_slice %150 {offsets = [0, 128], sizes = [1, 64], strides = [1, 1]} : vector<1x256xf32> to vector<1x64xf32>
    %164 = math.tanh %163 : vector<1x64xf32>
    %165 = vector.extract_strided_slice %150 {offsets = [0, 192], sizes = [1, 64], strides = [1, 1]} : vector<1x256xf32> to vector<1x64xf32>
    %166 = arith.negf %165 : vector<1x64xf32>
    %167 = math.exp %166 : vector<1x64xf32>
    %cst_43 = arith.constant 1.000000e+00 : f32
    %168 = vector.broadcast %cst_43 : f32 to vector<1x64xf32>
    %169 = arith.addf %168, %167 : vector<1x64xf32>
    %170 = arith.divf %168, %169 : vector<1x64xf32>
    %171 = arith.mulf %162, %136 : vector<1x64xf32>
    %172 = arith.mulf %156, %164 : vector<1x64xf32>
    %173 = arith.addf %171, %172 : vector<1x64xf32>
    %174 = math.tanh %173 : vector<1x64xf32>
    %175 = arith.mulf %170, %174 : vector<1x64xf32>
    %176 = vector.extract_strided_slice %175 {offsets = [0, 0], sizes = [1, 32], strides = [1, 1]} : vector<1x64xf32> to vector<1x32xf32>
    %177 = vector.extract_strided_slice %175 {offsets = [0, 32], sizes = [1, 32], strides = [1, 1]} : vector<1x64xf32> to vector<1x32xf32>
    %c4_i32 = arith.constant 4 : i32
    %178 = arith.addi %29, %c4_i32 : i32
    %c7_i32_44 = arith.constant 7 : i32
    %179 = arith.subi %c7_i32_44, %178 : i32
    %180 = arith.truncf %175 : vector<1x64xf32> to vector<1x64xbf16>
    %cst_45 = arith.constant dense<0.000000e+00> : vector<1x256xf32>
    %181 = tpu.matmul %180, %26, %cst_45 {dimension_numbers = #tpu.dot_dimension_numbers<[1], [0], [0], [1], [0, 0, 1, 1], [], []>} : vector<1x64xbf16>, vector<64x256xbf16>, vector<1x256xf32> -> vector<1x256xf32>
    %182 = arith.index_cast %178 : i32 to index
    %c0_46 = arith.constant 0 : index
    %183 = vector.load %arg5[%182, %c0_46] : memref<8x256xf32, #tpu.memory_space<vmem>>, vector<1x256xf32>
    %184 = arith.index_cast %179 : i32 to index
    %c0_47 = arith.constant 0 : index
    %185 = vector.load %arg5[%184, %c0_47] : memref<8x256xf32, #tpu.memory_space<vmem>>, vector<1x256xf32>
    %186 = arith.select %25, %183, %185 : vector<1x256xi1>, vector<1x256xf32>
    %187 = arith.addf %186, %181 : vector<1x256xf32>
    %188 = vector.extract_strided_slice %187 {offsets = [0, 0], sizes = [1, 64], strides = [1, 1]} : vector<1x256xf32> to vector<1x64xf32>
    %189 = arith.negf %188 : vector<1x64xf32>
    %190 = math.exp %189 : vector<1x64xf32>
    %cst_48 = arith.constant 1.000000e+00 : f32
    %191 = vector.broadcast %cst_48 : f32 to vector<1x64xf32>
    %192 = arith.addf %191, %190 : vector<1x64xf32>
    %193 = arith.divf %191, %192 : vector<1x64xf32>
    %194 = vector.extract_strided_slice %187 {offsets = [0, 64], sizes = [1, 64], strides = [1, 1]} : vector<1x256xf32> to vector<1x64xf32>
    %195 = arith.negf %194 : vector<1x64xf32>
    %196 = math.exp %195 : vector<1x64xf32>
    %cst_49 = arith.constant 1.000000e+00 : f32
    %197 = vector.broadcast %cst_49 : f32 to vector<1x64xf32>
    %198 = arith.addf %197, %196 : vector<1x64xf32>
    %199 = arith.divf %197, %198 : vector<1x64xf32>
    %200 = vector.extract_strided_slice %187 {offsets = [0, 128], sizes = [1, 64], strides = [1, 1]} : vector<1x256xf32> to vector<1x64xf32>
    %201 = math.tanh %200 : vector<1x64xf32>
    %202 = vector.extract_strided_slice %187 {offsets = [0, 192], sizes = [1, 64], strides = [1, 1]} : vector<1x256xf32> to vector<1x64xf32>
    %203 = arith.negf %202 : vector<1x64xf32>
    %204 = math.exp %203 : vector<1x64xf32>
    %cst_50 = arith.constant 1.000000e+00 : f32
    %205 = vector.broadcast %cst_50 : f32 to vector<1x64xf32>
    %206 = arith.addf %205, %204 : vector<1x64xf32>
    %207 = arith.divf %205, %206 : vector<1x64xf32>
    %208 = arith.mulf %199, %173 : vector<1x64xf32>
    %209 = arith.mulf %193, %201 : vector<1x64xf32>
    %210 = arith.addf %208, %209 : vector<1x64xf32>
    %211 = math.tanh %210 : vector<1x64xf32>
    %212 = arith.mulf %207, %211 : vector<1x64xf32>
    %213 = vector.extract_strided_slice %212 {offsets = [0, 0], sizes = [1, 32], strides = [1, 1]} : vector<1x64xf32> to vector<1x32xf32>
    %214 = vector.extract_strided_slice %212 {offsets = [0, 32], sizes = [1, 32], strides = [1, 1]} : vector<1x64xf32> to vector<1x32xf32>
    %c5_i32 = arith.constant 5 : i32
    %215 = arith.addi %29, %c5_i32 : i32
    %c7_i32_51 = arith.constant 7 : i32
    %216 = arith.subi %c7_i32_51, %215 : i32
    %217 = arith.truncf %212 : vector<1x64xf32> to vector<1x64xbf16>
    %cst_52 = arith.constant dense<0.000000e+00> : vector<1x256xf32>
    %218 = tpu.matmul %217, %26, %cst_52 {dimension_numbers = #tpu.dot_dimension_numbers<[1], [0], [0], [1], [0, 0, 1, 1], [], []>} : vector<1x64xbf16>, vector<64x256xbf16>, vector<1x256xf32> -> vector<1x256xf32>
    %219 = arith.index_cast %215 : i32 to index
    %c0_53 = arith.constant 0 : index
    %220 = vector.load %arg5[%219, %c0_53] : memref<8x256xf32, #tpu.memory_space<vmem>>, vector<1x256xf32>
    %221 = arith.index_cast %216 : i32 to index
    %c0_54 = arith.constant 0 : index
    %222 = vector.load %arg5[%221, %c0_54] : memref<8x256xf32, #tpu.memory_space<vmem>>, vector<1x256xf32>
    %223 = arith.select %25, %220, %222 : vector<1x256xi1>, vector<1x256xf32>
    %224 = arith.addf %223, %218 : vector<1x256xf32>
    %225 = vector.extract_strided_slice %224 {offsets = [0, 0], sizes = [1, 64], strides = [1, 1]} : vector<1x256xf32> to vector<1x64xf32>
    %226 = arith.negf %225 : vector<1x64xf32>
    %227 = math.exp %226 : vector<1x64xf32>
    %cst_55 = arith.constant 1.000000e+00 : f32
    %228 = vector.broadcast %cst_55 : f32 to vector<1x64xf32>
    %229 = arith.addf %228, %227 : vector<1x64xf32>
    %230 = arith.divf %228, %229 : vector<1x64xf32>
    %231 = vector.extract_strided_slice %224 {offsets = [0, 64], sizes = [1, 64], strides = [1, 1]} : vector<1x256xf32> to vector<1x64xf32>
    %232 = arith.negf %231 : vector<1x64xf32>
    %233 = math.exp %232 : vector<1x64xf32>
    %cst_56 = arith.constant 1.000000e+00 : f32
    %234 = vector.broadcast %cst_56 : f32 to vector<1x64xf32>
    %235 = arith.addf %234, %233 : vector<1x64xf32>
    %236 = arith.divf %234, %235 : vector<1x64xf32>
    %237 = vector.extract_strided_slice %224 {offsets = [0, 128], sizes = [1, 64], strides = [1, 1]} : vector<1x256xf32> to vector<1x64xf32>
    %238 = math.tanh %237 : vector<1x64xf32>
    %239 = vector.extract_strided_slice %224 {offsets = [0, 192], sizes = [1, 64], strides = [1, 1]} : vector<1x256xf32> to vector<1x64xf32>
    %240 = arith.negf %239 : vector<1x64xf32>
    %241 = math.exp %240 : vector<1x64xf32>
    %cst_57 = arith.constant 1.000000e+00 : f32
    %242 = vector.broadcast %cst_57 : f32 to vector<1x64xf32>
    %243 = arith.addf %242, %241 : vector<1x64xf32>
    %244 = arith.divf %242, %243 : vector<1x64xf32>
    %245 = arith.mulf %236, %210 : vector<1x64xf32>
    %246 = arith.mulf %230, %238 : vector<1x64xf32>
    %247 = arith.addf %245, %246 : vector<1x64xf32>
    %248 = math.tanh %247 : vector<1x64xf32>
    %249 = arith.mulf %244, %248 : vector<1x64xf32>
    %250 = vector.extract_strided_slice %249 {offsets = [0, 0], sizes = [1, 32], strides = [1, 1]} : vector<1x64xf32> to vector<1x32xf32>
    %251 = vector.extract_strided_slice %249 {offsets = [0, 32], sizes = [1, 32], strides = [1, 1]} : vector<1x64xf32> to vector<1x32xf32>
    %c6_i32 = arith.constant 6 : i32
    %252 = arith.addi %29, %c6_i32 : i32
    %c7_i32_58 = arith.constant 7 : i32
    %253 = arith.subi %c7_i32_58, %252 : i32
    %254 = arith.truncf %249 : vector<1x64xf32> to vector<1x64xbf16>
    %cst_59 = arith.constant dense<0.000000e+00> : vector<1x256xf32>
    %255 = tpu.matmul %254, %26, %cst_59 {dimension_numbers = #tpu.dot_dimension_numbers<[1], [0], [0], [1], [0, 0, 1, 1], [], []>} : vector<1x64xbf16>, vector<64x256xbf16>, vector<1x256xf32> -> vector<1x256xf32>
    %256 = arith.index_cast %252 : i32 to index
    %c0_60 = arith.constant 0 : index
    %257 = vector.load %arg5[%256, %c0_60] : memref<8x256xf32, #tpu.memory_space<vmem>>, vector<1x256xf32>
    %258 = arith.index_cast %253 : i32 to index
    %c0_61 = arith.constant 0 : index
    %259 = vector.load %arg5[%258, %c0_61] : memref<8x256xf32, #tpu.memory_space<vmem>>, vector<1x256xf32>
    %260 = arith.select %25, %257, %259 : vector<1x256xi1>, vector<1x256xf32>
    %261 = arith.addf %260, %255 : vector<1x256xf32>
    %262 = vector.extract_strided_slice %261 {offsets = [0, 0], sizes = [1, 64], strides = [1, 1]} : vector<1x256xf32> to vector<1x64xf32>
    %263 = arith.negf %262 : vector<1x64xf32>
    %264 = math.exp %263 : vector<1x64xf32>
    %cst_62 = arith.constant 1.000000e+00 : f32
    %265 = vector.broadcast %cst_62 : f32 to vector<1x64xf32>
    %266 = arith.addf %265, %264 : vector<1x64xf32>
    %267 = arith.divf %265, %266 : vector<1x64xf32>
    %268 = vector.extract_strided_slice %261 {offsets = [0, 64], sizes = [1, 64], strides = [1, 1]} : vector<1x256xf32> to vector<1x64xf32>
    %269 = arith.negf %268 : vector<1x64xf32>
    %270 = math.exp %269 : vector<1x64xf32>
    %cst_63 = arith.constant 1.000000e+00 : f32
    %271 = vector.broadcast %cst_63 : f32 to vector<1x64xf32>
    %272 = arith.addf %271, %270 : vector<1x64xf32>
    %273 = arith.divf %271, %272 : vector<1x64xf32>
    %274 = vector.extract_strided_slice %261 {offsets = [0, 128], sizes = [1, 64], strides = [1, 1]} : vector<1x256xf32> to vector<1x64xf32>
    %275 = math.tanh %274 : vector<1x64xf32>
    %276 = vector.extract_strided_slice %261 {offsets = [0, 192], sizes = [1, 64], strides = [1, 1]} : vector<1x256xf32> to vector<1x64xf32>
    %277 = arith.negf %276 : vector<1x64xf32>
    %278 = math.exp %277 : vector<1x64xf32>
    %cst_64 = arith.constant 1.000000e+00 : f32
    %279 = vector.broadcast %cst_64 : f32 to vector<1x64xf32>
    %280 = arith.addf %279, %278 : vector<1x64xf32>
    %281 = arith.divf %279, %280 : vector<1x64xf32>
    %282 = arith.mulf %273, %247 : vector<1x64xf32>
    %283 = arith.mulf %267, %275 : vector<1x64xf32>
    %284 = arith.addf %282, %283 : vector<1x64xf32>
    %285 = math.tanh %284 : vector<1x64xf32>
    %286 = arith.mulf %281, %285 : vector<1x64xf32>
    %287 = vector.extract_strided_slice %286 {offsets = [0, 0], sizes = [1, 32], strides = [1, 1]} : vector<1x64xf32> to vector<1x32xf32>
    %288 = vector.extract_strided_slice %286 {offsets = [0, 32], sizes = [1, 32], strides = [1, 1]} : vector<1x64xf32> to vector<1x32xf32>
    %c7_i32_65 = arith.constant 7 : i32
    %289 = arith.addi %29, %c7_i32_65 : i32
    %c7_i32_66 = arith.constant 7 : i32
    %290 = arith.subi %c7_i32_66, %289 : i32
    %291 = arith.truncf %286 : vector<1x64xf32> to vector<1x64xbf16>
    %cst_67 = arith.constant dense<0.000000e+00> : vector<1x256xf32>
    %292 = tpu.matmul %291, %26, %cst_67 {dimension_numbers = #tpu.dot_dimension_numbers<[1], [0], [0], [1], [0, 0, 1, 1], [], []>} : vector<1x64xbf16>, vector<64x256xbf16>, vector<1x256xf32> -> vector<1x256xf32>
    %293 = arith.index_cast %289 : i32 to index
    %c0_68 = arith.constant 0 : index
    %294 = vector.load %arg5[%293, %c0_68] : memref<8x256xf32, #tpu.memory_space<vmem>>, vector<1x256xf32>
    %295 = arith.index_cast %290 : i32 to index
    %c0_69 = arith.constant 0 : index
    %296 = vector.load %arg5[%295, %c0_69] : memref<8x256xf32, #tpu.memory_space<vmem>>, vector<1x256xf32>
    %297 = arith.select %25, %294, %296 : vector<1x256xi1>, vector<1x256xf32>
    %298 = arith.addf %297, %292 : vector<1x256xf32>
    %299 = vector.extract_strided_slice %298 {offsets = [0, 0], sizes = [1, 64], strides = [1, 1]} : vector<1x256xf32> to vector<1x64xf32>
    %300 = arith.negf %299 : vector<1x64xf32>
    %301 = math.exp %300 : vector<1x64xf32>
    %cst_70 = arith.constant 1.000000e+00 : f32
    %302 = vector.broadcast %cst_70 : f32 to vector<1x64xf32>
    %303 = arith.addf %302, %301 : vector<1x64xf32>
    %304 = arith.divf %302, %303 : vector<1x64xf32>
    %305 = vector.extract_strided_slice %298 {offsets = [0, 64], sizes = [1, 64], strides = [1, 1]} : vector<1x256xf32> to vector<1x64xf32>
    %306 = arith.negf %305 : vector<1x64xf32>
    %307 = math.exp %306 : vector<1x64xf32>
    %cst_71 = arith.constant 1.000000e+00 : f32
    %308 = vector.broadcast %cst_71 : f32 to vector<1x64xf32>
    %309 = arith.addf %308, %307 : vector<1x64xf32>
    %310 = arith.divf %308, %309 : vector<1x64xf32>
    %311 = vector.extract_strided_slice %298 {offsets = [0, 128], sizes = [1, 64], strides = [1, 1]} : vector<1x256xf32> to vector<1x64xf32>
    %312 = math.tanh %311 : vector<1x64xf32>
    %313 = vector.extract_strided_slice %298 {offsets = [0, 192], sizes = [1, 64], strides = [1, 1]} : vector<1x256xf32> to vector<1x64xf32>
    %314 = arith.negf %313 : vector<1x64xf32>
    %315 = math.exp %314 : vector<1x64xf32>
    %cst_72 = arith.constant 1.000000e+00 : f32
    %316 = vector.broadcast %cst_72 : f32 to vector<1x64xf32>
    %317 = arith.addf %316, %315 : vector<1x64xf32>
    %318 = arith.divf %316, %317 : vector<1x64xf32>
    %319 = arith.mulf %310, %284 : vector<1x64xf32>
    %320 = arith.mulf %304, %312 : vector<1x64xf32>
    %321 = arith.addf %319, %320 : vector<1x64xf32>
    %322 = math.tanh %321 : vector<1x64xf32>
    %323 = arith.mulf %318, %322 : vector<1x64xf32>
    %324 = vector.extract_strided_slice %323 {offsets = [0, 0], sizes = [1, 32], strides = [1, 1]} : vector<1x64xf32> to vector<1x32xf32>
    %325 = vector.extract_strided_slice %323 {offsets = [0, 32], sizes = [1, 32], strides = [1, 1]} : vector<1x64xf32> to vector<1x32xf32>
    %326 = tpu.concatenate %65, %102, %139, %176, %213, %250, %287, %324 in 0 : vector<1x32xf32>, vector<1x32xf32>, vector<1x32xf32>, vector<1x32xf32>, vector<1x32xf32>, vector<1x32xf32>, vector<1x32xf32>, vector<1x32xf32> -> vector<8x32xf32>
    %327 = arith.truncf %326 : vector<8x32xf32> to vector<8x32xbf16>
    %328 = arith.index_cast %29 : i32 to index
    %c0_73 = arith.constant 0 : index
    %329 = vector.load %arg4[%328, %c0_73] : memref<8x64xbf16, #tpu.memory_space<vmem>>, vector<8x32xbf16>
    tpu.vector_store %arg4[%328, %c0_73], %327 {strides = array<i32>} : memref<8x64xbf16, #tpu.memory_space<vmem>>, vector<8x32xbf16>,
    %330 = tpu.concatenate %325, %288, %251, %214, %177, %140, %103, %66 in 0 : vector<1x32xf32>, vector<1x32xf32>, vector<1x32xf32>, vector<1x32xf32>, vector<1x32xf32>, vector<1x32xf32>, vector<1x32xf32>, vector<1x32xf32> -> vector<8x32xf32>
    %331 = arith.truncf %330 : vector<8x32xf32> to vector<8x32xbf16>
    %c8_i32_74 = arith.constant 8 : i32
    %332 = arith.subi %c8_i32_74, %29 : i32
    %c8_i32_75 = arith.constant 8 : i32
    %333 = arith.subi %332, %c8_i32_75 : i32
    %334 = arith.index_cast %333 : i32 to index
    %c32 = arith.constant 32 : index
    %335 = vector.load %arg4[%334, %c32] : memref<8x64xbf16, #tpu.memory_space<vmem>>, vector<8x32xbf16>
    tpu.vector_store %arg4[%334, %c32], %331 {strides = array<i32>} : memref<8x64xbf16, #tpu.memory_space<vmem>>, vector<8x32xbf16>,
    %c1_i32_76 = arith.constant 1 : i32
    return
  }
}

</mosaic_0001>

<llo_original>
// kernel: edee_forward.3
$region0: #{edee_forward.3}
  #allocation0 [shape = 'u32[]', space=smem, size = 0x4, offset = 0x4, fixed_abs, tag = 'smem constant byte address 0x4 - core index']
  #allocation1 [shape = 'u32[144,128]{1,0:T(1,128)}', space=vmem, size = 0x12000, scoped, tag = 'internal scratch']
  %s0 = inlined_call_operand.vmem [shape: f32[8,64], index: 0, kind: input, shape index: {}]
  %s1 = inlined_call_operand.vmem [shape: f32[8,64], index: 1, kind: input, shape index: {}]
  %s2 = inlined_call_operand.vmem [shape: bf16[64,64], index: 2, kind: input, shape index: {}]
  %s3 = inlined_call_operand.vmem [shape: f32[1,64], index: 3, kind: input, shape index: {}]
  %s4 = inlined_call_operand.vmem [shape: bf16[64,8], index: 4, kind: input, shape index: {}]
  %s5 = inlined_call_operand.vmem [shape: f32[1,8], index: 5, kind: input, shape index: {}]
  %s6 = inlined_call_operand.vmem [shape: f32[64,8], index: 6, kind: output, shape index: {}]
  %s7 = sld [smem:[#allocation0]]
  $region57: #{edee_forward.3} parent=0
    _
  %s9 = ssub.s32 1, %s7
  %s10 = scalar_select 0, %s9, %s7
  loop: start=0, step=1, limit=4
  $region2: #{edee_forward.3} parent=0 // loop_pre_header
    _
  $region3: #{edee_forward.3} parent=0 // loop_header
    %s12 = sphi 0, %s16
    %p13 = scmp.ge.s32.totalorder %s12, 4
    %s20 = sphi 0, %s20
    %s22 = sphi 0, %s20
    %s23 = sphi 0, %s22
    %s37 = sphi 0, %s23
    %s41 = sphi 0, %s41
    %s43 = sphi 0, %s41
    %s44 = sphi 0, %s43
    %s58 = sphi 0, %s44
    %s62 = sphi 0, %s62
    %s64 = sphi 0, %s62
    %s65 = sphi 0, %s64
    %s79 = sphi 0, %s65
    %s83 = sphi 0, %s83
    %s85 = sphi 0, %s83
    %s86 = sphi 0, %s85
    %s100 = sphi 0, %s86
    %s104 = sphi 0, %s104
    %s106 = sphi 0, %s104
    %s107 = sphi 0, %s106
    %s121 = sphi 0, %s107
    %s125 = sphi 0, %s125
    %s127 = sphi 0, %s125
    %s128 = sphi 0, %s127
    %s142 = sphi 0, %s128
    %s148 = sphi 0, %s150
    %s151 = sphi 0, %s148
    %s152 = sphi 0, %s151
    %s168 = sphi 0, %s152
  $region4: #{edee_forward.3} parent=0 // loop_header_branch
    %15 = sbr.rel (%p13) target = $region8
  $region5: #{edee_forward.3} parent=0 // loop_body
    %s17 = ssub.s32 %s12, 1
    %s18 = ssub.s32 %s12, 2
    %s19 = sadd.s32 %s12, 1
    %s21 = sadd.s32 %s20, 1
    %p24 = scmp.eq.s32.totalorder %s12, 1
    %p25 = scmp.ne.s32.totalorder %s20, %s22
    %p26 = scmp.eq.s32.totalorder %s12, 0
    %p27 = por %p25, %p26
    %p28 = scmp.ne.s32.totalorder %s20, %s22
    %p29 = scmp.eq.s32.totalorder %s17, 1
    %p30 = por %p28, %p29
    %p31 = scmp.ne.s32.totalorder %s22, %s23
    %p32 = scmp.eq.s32.totalorder %s17, 0
    %p33 = por %p31, %p32
    %p34 = scmp.ne.s32.totalorder %s22, %s23
    %p35 = scmp.eq.s32.totalorder %s18, 1
    %p36 = por %p34, %p35
    %p38 = scmp.ne.s32.totalorder %s23, %s37
    %p39 = scmp.eq.s32.totalorder %s18, 0
    %p40 = por %p38, %p39
    %s42 = sadd.s32 %s41, 1
    %p45 = scmp.eq.s32.totalorder %s12, 1
    %p46 = scmp.ne.s32.totalorder %s41, %s43
    %p47 = scmp.eq.s32.totalorder %s12, 0
    %p48 = por %p46, %p47
    %p49 = scmp.ne.s32.totalorder %s41, %s43
    %p50 = scmp.eq.s32.totalorder %s17, 1
    %p51 = por %p49, %p50
    %p52 = scmp.ne.s32.totalorder %s43, %s44
    %p53 = scmp.eq.s32.totalorder %s17, 0
    %p54 = por %p52, %p53
    %p55 = scmp.ne.s32.totalorder %s43, %s44
    %p56 = scmp.eq.s32.totalorder %s18, 1
    %p57 = por %p55, %p56
    %p59 = scmp.ne.s32.totalorder %s44, %s58
    %p60 = scmp.eq.s32.totalorder %s18, 0
    %p61 = por %p59, %p60
    %s63 = sadd.s32 %s62, 1
    %p66 = scmp.eq.s32.totalorder %s12, 1
    %p67 = scmp.ne.s32.totalorder %s62, %s64
    %p68 = scmp.eq.s32.totalorder %s12, 0
    %p69 = por %p67, %p68
    %p70 = scmp.ne.s32.totalorder %s62, %s64
    %p71 = scmp.eq.s32.totalorder %s17, 1
    %p72 = por %p70, %p71
    %p73 = scmp.ne.s32.totalorder %s64, %s65
    %p74 = scmp.eq.s32.totalorder %s17, 0
    %p75 = por %p73, %p74
    %p76 = scmp.ne.s32.totalorder %s64, %s65
    %p77 = scmp.eq.s32.totalorder %s18, 1
    %p78 = por %p76, %p77
    %p80 = scmp.ne.s32.totalorder %s65, %s79
    %p81 = scmp.eq.s32.totalorder %s18, 0
    %p82 = por %p80, %p81
    %s84 = sadd.s32 %s83, 1
    %p87 = scmp.eq.s32.totalorder %s12, 1
    %p88 = scmp.ne.s32.totalorder %s83, %s85
    %p89 = scmp.eq.s32.totalorder %s12, 0
    %p90 = por %p88, %p89
    %p91 = scmp.ne.s32.totalorder %s83, %s85
    %p92 = scmp.eq.s32.totalorder %s17, 1
    %p93 = por %p91, %p92
    %p94 = scmp.ne.s32.totalorder %s85, %s86
    %p95 = scmp.eq.s32.totalorder %s17, 0
    %p96 = por %p94, %p95
    %p97 = scmp.ne.s32.totalorder %s85, %s86
    %p98 = scmp.eq.s32.totalorder %s18, 1
    %p99 = por %p97, %p98
    %p101 = scmp.ne.s32.totalorder %s86, %s100
    %p102 = scmp.eq.s32.totalorder %s18, 0
    %p103 = por %p101, %p102
    %s105 = sadd.s32 %s104, 1
    %p108 = scmp.eq.s32.totalorder %s12, 1
    %p109 = scmp.ne.s32.totalorder %s104, %s106
    %p110 = scmp.eq.s32.totalorder %s12, 0
    %p111 = por %p109, %p110
    %p112 = scmp.ne.s32.totalorder %s104, %s106
    %p113 = scmp.eq.s32.totalorder %s17, 1
    %p114 = por %p112, %p113
    %p115 = scmp.ne.s32.totalorder %s106, %s107
    %p116 = scmp.eq.s32.totalorder %s17, 0
    %p117 = por %p115, %p116
    %p118 = scmp.ne.s32.totalorder %s106, %s107
    %p119 = scmp.eq.s32.totalorder %s18, 1
    %p120 = por %p118, %p119
    %p122 = scmp.ne.s32.totalorder %s107, %s121
    %p123 = scmp.eq.s32.totalorder %s18, 0
    %p124 = por %p122, %p123
    %s126 = sadd.s32 %s125, 1
    %p129 = scmp.eq.s32.totalorder %s12, 1
    %p130 = scmp.ne.s32.totalorder %s125, %s127
    %p131 = scmp.eq.s32.totalorder %s12, 0
    %p132 = por %p130, %p131
    %p133 = scmp.ne.s32.totalorder %s125, %s127
    %p134 = scmp.eq.s32.totalorder %s17, 1
    %p135 = por %p133, %p134
    %p136 = scmp.ne.s32.totalorder %s127, %s128
    %p137 = scmp.eq.s32.totalorder %s17, 0
    %p138 = por %p136, %p137
    %p139 = scmp.ne.s32.totalorder %s127, %s128
    %p140 = scmp.eq.s32.totalorder %s18, 1
    %p141 = por %p139, %p140
    %p143 = scmp.ne.s32.totalorder %s128, %s142
    %p144 = scmp.eq.s32.totalorder %s18, 0
    %p145 = por %p143, %p144
    %s146 = ssub.s32 %s12, %s19
    %p147 = scmp.eq.s32.totalorder %s146, 0
    %s149 = sadd.s32 %s148, 1
    %s150 = scalar_select %p147, %s148, %s149
    %p153 = pneg %p147
    %p154 = scmp.eq.s32.totalorder %s12, 1
    %p155 = por %p153, %p154
    %p156 = scmp.ne.s32.totalorder %s148, %s151
    %p157 = scmp.eq.s32.totalorder %s12, 0
    %p158 = por %p156, %p157
    %p159 = scmp.ne.s32.totalorder %s148, %s151
    %p160 = scmp.eq.s32.totalorder %s17, 1
    %p161 = por %p159, %p160
    %p162 = scmp.ne.s32.totalorder %s151, %s152
    %p163 = scmp.eq.s32.totalorder %s17, 0
    %p164 = por %p162, %p163
    %p165 = scmp.ne.s32.totalorder %s151, %s152
    %p166 = scmp.eq.s32.totalorder %s18, 1
    %p167 = por %p165, %p166
    %p169 = scmp.ne.s32.totalorder %s152, %s168
    %p170 = scmp.eq.s32.totalorder %s18, 0
    %p171 = por %p169, %p170
    %p172 = scmp.le.s32.totalorder 1, %s12
    %p173 = scmp.lt.s32.totalorder %s12, 3
    %p174 = pnand %p172, %p173
    %p175 = pneg %p174
    // Predicated region
    $region9: #{edee_forward.3} parent=5 // pred_check
      _
    $region10: #{edee_forward.3} parent=5 // pred_check_branch
      %177 = sbr.rel (%p174) target = $region12
    $region11: #{edee_forward.3} parent=5 // pred_region
      %s178 = ssub.s32 %s12, 1
      // Predicated region
      $region13: #{edee_forward.3} parent=11 // pred_check
        %p179 = pneg %p33
      $region14: #{edee_forward.3} parent=11 // pred_check_branch
        %181 = sbr.rel (%p179) target = $region16
      $region15: #{edee_forward.3} parent=11 // pred_region
        _
      $region16: #{edee_forward.3} parent=11 // pred_fallthru
        _
      // Predicated region
      $region17: #{edee_forward.3} parent=11 // pred_check
        %p182 = pneg %p54
      $region18: #{edee_forward.3} parent=11 // pred_check_branch
        %184 = sbr.rel (%p182) target = $region20
      $region19: #{edee_forward.3} parent=11 // pred_region
        _
      $region20: #{edee_forward.3} parent=11 // pred_fallthru
        _
      // Predicated region
      $region21: #{edee_forward.3} parent=11 // pred_check
        %p185 = pneg %p75
      $region22: #{edee_forward.3} parent=11 // pred_check_branch
        %187 = sbr.rel (%p185) target = $region24
      $region23: #{edee_forward.3} parent=11 // pred_region
        _
      $region24: #{edee_forward.3} parent=11 // pred_fallthru
        _
      // Predicated region
      $region25: #{edee_forward.3} parent=11 // pred_check
        %p188 = pneg %p96
      $region26: #{edee_forward.3} parent=11 // pred_check_branch
        %190 = sbr.rel (%p188) target = $region28
      $region27: #{edee_forward.3} parent=11 // pred_region
        _
      $region28: #{edee_forward.3} parent=11 // pred_fallthru
        _
      // Predicated region
      $region29: #{edee_forward.3} parent=11 // pred_check
        %p191 = pneg %p117
      $region30: #{edee_forward.3} parent=11 // pred_check_branch
        %193 = sbr.rel (%p191) target = $region32
      $region31: #{edee_forward.3} parent=11 // pred_region
        _
      $region32: #{edee_forward.3} parent=11 // pred_fallthru
        _
      // Predicated region
      $region33: #{edee_forward.3} parent=11 // pred_check
        %p194 = pneg %p138
      $region34: #{edee_forward.3} parent=11 // pred_check_branch
        %196 = sbr.rel (%p194) target = $region36
      $region35: #{edee_forward.3} parent=11 // pred_region
        _
      $region36: #{edee_forward.3} parent=11 // pred_fallthru
        _
    $region12: #{edee_forward.3} parent=5 // pred_fallthru
      _
    %p197 = scmp.lt.s32.totalorder %s12, 2
    // Predicated region
    $region37: #{edee_forward.3} parent=5 // pred_check
      %p198 = pneg %p197
    $region38: #{edee_forward.3} parent=5 // pred_check_branch
      %200 = sbr.rel (%p198) target = $region40
    $region39: #{edee_forward.3} parent=5 // pred_region
      _
    $region40: #{edee_forward.3} parent=5 // pred_fallthru
      _
    %p201 = scmp.le.s32.totalorder 1, %s12
    %p202 = scmp.lt.s32.totalorder %s12, 3
    %p203 = pnand %p201, %p202
    %p204 = pneg %p203
    // Predicated region
    $region41: #{edee_forward.3} parent=5 // pred_check
      _
    $region42: #{edee_forward.3} parent=5 // pred_check_branch
      %206 = sbr.rel (%p203) target = $region44
    $region43: #{edee_forward.3} parent=5 // pred_region
      %s207 = ssub.s32 %s12, 1
      %p208 = pneg %p33
      %p209 = pneg %p30
      %p210 = pneg %p54
      %p211 = pneg %p51
      %p212 = pneg %p75
      %p213 = pneg %p72
      %p214 = pneg %p96
      %p215 = pneg %p93
      %p216 = pneg %p117
      %p217 = pneg %p114
      %p218 = pneg %p138
      %p219 = pneg %p135
      %p220 = pneg %p164
      %p221 = pneg %p161
      %s222 = smul.u32 4, %s17
      %p223 = scmp.lt.s32.totalorder %s222, 7
      %s224 = scalar_select %p223, %s222, 7
      %s225 = smul.addr %s224, 8
      %s226 = scalar_lea.vmem %s6, %s225
      %s227 = smul.u32 4, %s17
      %p228 = scmp.lt.s32.totalorder %s227, 7
      %s229 = scalar_select %p228, %s227, 7
      %s230 = smul.addr %s229, 8
      %s231 = scalar_lea.vmem %s6, %s230
      %s232 = smul.u32 4, %s17
      %s234 = smul.u32 %s17, 4
      %s235 = scalar_lea.vmem %s0, %s234
      %v236 = vld [vmem:[%s235] sm:$0xf]
      %v239 = vunpack.c.l.s4 1966171168
      %v240 = vunpack.c.0.s8 %v239
      %v241 = vlaneseq
      %v242 = vshrl.u32 %v241, 7
      %v243 = vsub.s32 %v240, %v242
      %v244 = vrot.slane %v236, %v243
      %v245 = vcombine.high %v244, %v244
      %v247 = vunpack.c.l.s4 1966171168
      %v248 = vunpack.c.0.s8 %v247
      %v249 = vlaneseq
      %v250 = vshrl.u32 %v249, 7
      %v251 = vsub.s32 %v248, %v250
      %v252 = vrot.slane %v244, %v251
      %v254 = vunpack.c.l.s4 1966171168
      %v255 = vunpack.c.0.s8 %v254
      %v256 = vlaneseq
      %v257 = vshrl.u32 %v256, 7
      %v258 = vsub.s32 %v255, %v257
      %v259 = vrot.slane %v245, %v258
      %v260 = vcombine.high %v252, %v252
      %v261 = vcombine.high %v259, %v259
      %v262 = vlaneseq
      %v263 = vshrl.u32 %v262, 7
      %v264 = vsub.s32 0, %v263
      %v265 = vrot.slane %v252, %v264
      %v266 = vlaneseq
      %v267 = vshrl.u32 %v266, 7
      %v268 = vsub.s32 0, %v267
      %v269 = vrot.slane %v259, %v268
      %v270 = vlaneseq
      %v271 = vshrl.u32 %v270, 7
      %v272 = vsub.s32 0, %v271
      %v273 = vrot.slane %v260, %v272
      %v274 = vlaneseq
      %v275 = vshrl.u32 %v274, 7
      %v276 = vsub.s32 0, %v275
      %v277 = vrot.slane %v261, %v276
      %v282 = vld [vmem:[%s1] sm:$0xff]
      %v283 = vadd.f32 %v265, %v282
      %v284 = vadd.f32 %v269, %v282
      %v285 = vadd.f32 %v273, %v282
      %v286 = vadd.f32 %v277, %v282
      %vm287 = vcmp.gt.f32.partialorder %v283, 0.0
      %vm288 = vcmp.gt.f32.partialorder %v284, 0.0
      %vm289 = vcmp.gt.f32.partialorder %v285, 0.0
      %vm290 = vcmp.gt.f32.partialorder %v286, 0.0
      %v291 = vmul.f32 %v283, 0.01
      %v292 = vmul.f32 %v284, 0.01
      %v293 = vmul.f32 %v285, 0.01
      %v294 = vmul.f32 %v286, 0.01
      %v295 = vsel %vm287, %v283, %v291
      %v296 = vsel %vm288, %v284, %v292
      %v297 = vsel %vm289, %v285, %v293
      %v298 = vsel %vm290, %v286, %v294
      %v299 = vpack.c.bf16 %v296, %v295
      %v300 = vpack.c.bf16 %v298, %v297
      %v301 = vld [vmem:[%s2] sm:$0xf]
      %v302 = vld [vmem:[%s2 + $0x4] sm:$0xf]
      %v303 = vld [vmem:[%s2 + $0x8] sm:$0xf]
      %v304 = vld [vmem:[%s2 + $0xc] sm:$0xf]
      %v305 = vld [vmem:[%s2 + $0x10] sm:$0xf]
      %v306 = vld [vmem:[%s2 + $0x14] sm:$0xf]
      %v307 = vld [vmem:[%s2 + $0x18] sm:$0xf]
      %v308 = vld [vmem:[%s2 + $0x1c] sm:$0xf]
      %v309 = vld [vmem:[%s3] sm:$0x1]
      %v311 = vlaneseq
      %v312 = vshrl.u32 %v311, 7
      %v313 = vsub.s32 0, %v312
      %v314 = vrot.slane %v309, %v313
      %v324 = vunpack.c.l.b16 %v301
      %v325 = vunpack.c.l.b16 %v302
      %v326 = vunpack.c.l.b16 %v303
      %v327 = vunpack.c.l.b16 %v304
      %v328 = vunpack.c.l.b16 %v305
      %v329 = vunpack.c.l.b16 %v306
      %v330 = vunpack.c.l.b16 %v307
      %v331 = vunpack.c.l.b16 %v308
      %v332 = vpack.c.b16 %v325, %v324
      %v333 = vpack.c.b16 %v327, %v326
      %v334 = vpack.c.b16 %v329, %v328
      %v335 = vpack.c.b16 %v331, %v330
      %vm340 = vcmask 523264
      %v342 = vsel %vm340, %v299, 0
      %v345 = vsel %vm340, %v300, 0
      %347 = vmatprep.subr.bf16.mxu0 0
      %348 = vmatpush1.bf16.msra.mxu0 %v332
      %349 = vmatprep.subr.bf16.mxu0 0
      %350 = vmatpush1.bf16.msra.mxu0 %v333
      %351 = vmatprep.subr.bf16.mxu0 0
      %352 = vmatpush1.bf16.msra.mxu0 %v334
      %353 = vmatprep.subr.bf16.mxu0 0
      %354 = vmatpush1.bf16.msra.mxu0 %v335
      %355 = vmatprep.subr.bf16.mxu0 0
      %356 = vmatpush1.bf16.msra.mxu0 0
      %357 = vmatprep.subr.bf16.mxu0 0
      %358 = vmatpush1.bf16.msra.mxu0 0
      %359 = vmatprep.subr.bf16.mxu0 0
      %360 = vmatpush1.bf16.msra.mxu0 0
      %361 = vmatprep.subr.bf16.mxu0 0
      %362 = vmatpush1.bf16.msra.mxu0 0
      %363 = vmatprep.subr.bf16.mxu0 0
      %364 = vmatpush1.bf16.msra.mxu0 0
      %365 = vmatprep.subr.bf16.mxu0 0
      %366 = vmatpush1.bf16.msra.mxu0 0
      %367 = vmatprep.subr.bf16.mxu0 0
      %368 = vmatpush1.bf16.msra.mxu0 0
      %369 = vmatprep.subr.bf16.mxu0 0
      %370 = vmatpush1.bf16.msra.mxu0 0
      %371 = vmatprep.subr.bf16.mxu0 0
      %372 = vmatpush1.bf16.msra.mxu0 0
      %373 = vmatprep.subr.bf16.mxu0 0
      %374 = vmatpush1.bf16.msra.mxu0 0
      %375 = vmatprep.subr.bf16.mxu0 0
      %376 = vmatpush1.bf16.msra.mxu0 0
      %377 = vmatprep.subr.bf16.mxu0 0
      %378 = vmatpush1.bf16.msra.mxu0 0
      %379 = vmatprep.mubr.bf16.mxu0 0
      %380 = vmatmul.mubr.bf16.gmra.mrb[0].mxu0 %v342
      %v381 = vpop.f32.mrb[0].mxu0
      %v382 = vadd.f32 %v314, %v381
      %v383 = vpop.f32.mrb[0].mxu0
      %v384 = vpop.f32.mrb[0].mxu0
      %v385 = vadd.f32 %v314, %v384
      %v386 = vpop.f32.mrb[0].mxu0
      %387 = vmatprep.mubr.bf16.mxu0 0
      %388 = vmatmul.mubr.bf16.gmra.mrb[0].mxu0 %v345
      %v389 = vpop.f32.mrb[0].mxu0
      %v390 = vadd.f32 %v314, %v389
      %v391 = vpop.f32.mrb[0].mxu0
      %v392 = vpop.f32.mrb[0].mxu0
      %v393 = vadd.f32 %v314, %v392
      %v394 = vpop.f32.mrb[0].mxu0
      %395 = vdwg.mxu0
      %vm396 = vcmp.gt.f32.partialorder %v382, 0.0
      %vm397 = vcmp.gt.f32.partialorder %v385, 0.0
      %vm398 = vcmp.gt.f32.partialorder %v390, 0.0
      %vm399 = vcmp.gt.f32.partialorder %v393, 0.0
      %v400 = vmul.f32 %v382, 0.01
      %v401 = vmul.f32 %v385, 0.01
      %v402 = vmul.f32 %v390, 0.01
      %v403 = vmul.f32 %v393, 0.01
      %v404 = vsel %vm396, %v382, %v400
      %v405 = vsel %vm397, %v385, %v401
      %v406 = vsel %vm398, %v390, %v402
      %v407 = vsel %vm399, %v393, %v403
      %v408 = vpack.c.bf16 %v405, %v404
      %v409 = vpack.c.bf16 %v407, %v406
      %v410 = vld [vmem:[%s4] sm:$0xf]
      %v411 = vld [vmem:[%s4 + $0x4] sm:$0xf]
      %v412 = vld [vmem:[%s4 + $0x8] sm:$0xf]
      %v413 = vld [vmem:[%s4 + $0xc] sm:$0xf]
      %v414 = vld [vmem:[%s4 + $0x10] sm:$0xf]
      %v415 = vld [vmem:[%s4 + $0x14] sm:$0xf]
      %v416 = vld [vmem:[%s4 + $0x18] sm:$0xf]
      %v417 = vld [vmem:[%s4 + $0x1c] sm:$0xf]
      %v418 = vld [vmem:[%s5] sm:$0x1]
      %v420 = vlaneseq
      %v421 = vshrl.u32 %v420, 7
      %v422 = vsub.s32 0, %v421
      %v423 = vrot.slane %v418, %v422
      %v433 = vunpack.c.l.b16 %v410
      %v434 = vunpack.c.l.b16 %v411
      %v435 = vunpack.c.l.b16 %v412
      %v436 = vunpack.c.l.b16 %v413
      %v437 = vunpack.c.l.b16 %v414
      %v438 = vunpack.c.l.b16 %v415
      %v439 = vunpack.c.l.b16 %v416
      %v440 = vunpack.c.l.b16 %v417
      %v441 = vpack.c.b16 %v434, %v433
      %v442 = vpack.c.b16 %v436, %v435
      %v443 = vpack.c.b16 %v438, %v437
      %v444 = vpack.c.b16 %v440, %v439
      %v450 = vsel %vm340, %v408, 0
      %v453 = vsel %vm340, %v409, 0
      %455 = vmatprep.subr.bf16.mxu0 0
      %456 = vmatpush1.bf16.msra.mxu0 %v441
      %457 = vmatprep.subr.bf16.mxu0 0
      %458 = vmatpush1.bf16.msra.mxu0 %v442
      %459 = vmatprep.subr.bf16.mxu0 0
      %460 = vmatpush1.bf16.msra.mxu0 %v443
      %461 = vmatprep.subr.bf16.mxu0 0
      %462 = vmatpush1.bf16.msra.mxu0 %v444
      %463 = vmatprep.subr.bf16.mxu0 0
      %464 = vmatpush1.bf16.msra.mxu0 0
      %465 = vmatprep.subr.bf16.mxu0 0
      %466 = vmatpush1.bf16.msra.mxu0 0
      %467 = vmatprep.subr.bf16.mxu0 0
      %468 = vmatpush1.bf16.msra.mxu0 0
      %469 = vmatprep.subr.bf16.mxu0 0
      %470 = vmatpush1.bf16.msra.mxu0 0
      %471 = vmatprep.subr.bf16.mxu0 0
      %472 = vmatpush1.bf16.msra.mxu0 0
      %473 = vmatprep.subr.bf16.mxu0 0
      %474 = vmatpush1.bf16.msra.mxu0 0
      %475 = vmatprep.subr.bf16.mxu0 0
      %476 = vmatpush1.bf16.msra.mxu0 0
      %477 = vmatprep.subr.bf16.mxu0 0
      %478 = vmatpush1.bf16.msra.mxu0 0
      %479 = vmatprep.subr.bf16.mxu0 0
      %480 = vmatpush1.bf16.msra.mxu0 0
      %481 = vmatprep.subr.bf16.mxu0 0
      %482 = vmatpush1.bf16.msra.mxu0 0
      %483 = vmatprep.subr.bf16.mxu0 0
      %484 = vmatpush1.bf16.msra.mxu0 0
      %485 = vmatprep.subr.bf16.mxu0 0
      %486 = vmatpush1.bf16.msra.mxu0 0
      %487 = vmatprep.mubr.bf16.mxu0 0
      %488 = vmatmul.mubr.bf16.gmra.mrb[0].mxu0 %v450
      %v489 = vpop.f32.mrb[0].mxu0
      %v490 = vadd.f32 %v423, %v489
      %v491 = vpop.f32.mrb[0].mxu0
      %v492 = vpop.f32.mrb[0].mxu0
      %v493 = vadd.f32 %v423, %v492
      %v494 = vpop.f32.mrb[0].mxu0
      %495 = vmatprep.mubr.bf16.mxu0 0
      %496 = vmatmul.mubr.bf16.gmra.mrb[0].mxu0 %v453
      %v497 = vpop.f32.mrb[0].mxu0
      %v498 = vadd.f32 %v423, %v497
      %v499 = vpop.f32.mrb[0].mxu0
      %v500 = vpop.f32.mrb[0].mxu0
      %v501 = vadd.f32 %v423, %v500
      %v502 = vpop.f32.mrb[0].mxu0
      %503 = vdwg.mxu0
      %vm504 = vcmask 64512
      %505 = vst.msk [vmem:[%s231] sm:$0xff] %vm504, %v490
      %506 = vst.msk [vmem:[%s231 + $0x8] sm:$0xff] %vm504, %v493
      %507 = vst.msk [vmem:[%s231 + $0x10] sm:$0xff] %vm504, %v498
      %508 = vst.msk [vmem:[%s231 + $0x18] sm:$0xff] %vm504, %v501
      %s509 = smul.u32 4, %s17
      %p510 = scmp.lt.s32.totalorder %s509, 7
      %s511 = scalar_select %p510, %s509, 7
      %s512 = smul.addr %s511, 8
      %s513 = scalar_lea.vmem %s6, %s512
      // Predicated region
      $region45: #{edee_forward.3} parent=43 // pred_check
        %p514 = pneg %p161
      $region46: #{edee_forward.3} parent=43 // pred_check_branch
        %516 = sbr.rel (%p514) target = $region48
      $region47: #{edee_forward.3} parent=43 // pred_region
        %s517 = smul.u32 4, %s17
      $region48: #{edee_forward.3} parent=43 // pred_fallthru
        _
    $region44: #{edee_forward.3} parent=5 // pred_fallthru
      _
    %p518 = scmp.le.s32.totalorder 2, %s12
    // Predicated region
    $region49: #{edee_forward.3} parent=5 // pred_check
      %p519 = pneg %p518
    $region50: #{edee_forward.3} parent=5 // pred_check_branch
      %521 = sbr.rel (%p519) target = $region52
    $region51: #{edee_forward.3} parent=5 // pred_region
      %s522 = ssub.s32 %s12, 2
      // Predicated region
      $region53: #{edee_forward.3} parent=51 // pred_check
        %p523 = pneg %p167
      $region54: #{edee_forward.3} parent=51 // pred_check_branch
        %525 = sbr.rel (%p523) target = $region56
      $region55: #{edee_forward.3} parent=51 // pred_region
        %s526 = smul.u32 4, %s18
        %p527 = scmp.lt.s32.totalorder %s526, 7
        %s528 = scalar_select %p527, %s526, 7
        %s529 = smul.addr %s528, 8
        %s530 = scalar_lea.vmem %s6, %s529
      $region56: #{edee_forward.3} parent=51 // pred_fallthru
        _
    $region52: #{edee_forward.3} parent=5 // pred_fallthru
      _
  $region6: #{edee_forward.3} parent=0 // loop_footer
    %s16 = sadd.s32 1, %s12
  $region7: #{edee_forward.3} parent=0 // loop_footer_branch
    %11 = sbr.rel target = $region3
  $region8: #{edee_forward.3} parent=0 // loop_exit
    _

// kernel: edee_forward.2
$region0: #{edee_forward.2}
  #allocation0 [shape = 'u32[]', space=smem, size = 0x4, offset = 0x4, fixed_abs, tag = 'smem constant byte address 0x4 - core index']
  #allocation1 [shape = 'u32[144,128]{1,0:T(1,128)}', space=vmem, size = 0x12000, scoped, tag = 'internal scratch']
  #allocation2 [shape = 'f32[8,256]{1,0:T(8,128)}', space=vmem, size = 0x2000, scoped, tag = 'scratch operand']
  %s0 = inlined_call_operand.vmem [shape: bf16[8,64], index: 0, kind: input, shape index: {}]
  %s1 = inlined_call_operand.vmem [shape: bf16[64,256], index: 1, kind: input, shape index: {}]
  %s2 = inlined_call_operand.vmem [shape: bf16[64,256], index: 2, kind: input, shape index: {}]
  %s3 = inlined_call_operand.vmem [shape: f32[1,256], index: 3, kind: input, shape index: {}]
  %s4 = inlined_call_operand.vmem [shape: bf16[8,64], index: 4, kind: output, shape index: {}]
  %s5 = sld [smem:[#allocation0]]
  $region26: #{edee_forward.2} parent=0
    _
  %s7 = ssub.s32 1, %s5
  %s8 = scalar_select 0, %s7, %s5
  // Predicated region
  $region2: #{edee_forward.2} parent=0 // pred_check
    _
  $region3: #{edee_forward.2} parent=0 // pred_check_branch
    %10 = sbr.rel (0) target = $region5
  $region4: #{edee_forward.2} parent=0 // pred_region
    _
  $region5: #{edee_forward.2} parent=0 // pred_fallthru
    _
  // Predicated region
  $region6: #{edee_forward.2} parent=0 // pred_check
    _
  $region7: #{edee_forward.2} parent=0 // pred_check_branch
    %12 = sbr.rel (0) target = $region9
  $region8: #{edee_forward.2} parent=0 // pred_region
    _
  $region9: #{edee_forward.2} parent=0 // pred_fallthru
    _
  // Predicated region
  $region10: #{edee_forward.2} parent=0 // pred_check
    _
  $region11: #{edee_forward.2} parent=0 // pred_check_branch
    %14 = sbr.rel (0) target = $region13
  $region12: #{edee_forward.2} parent=0 // pred_region
    _
  $region13: #{edee_forward.2} parent=0 // pred_fallthru
    _
  // Predicated region
  $region14: #{edee_forward.2} parent=0 // pred_check
    _
  $region15: #{edee_forward.2} parent=0 // pred_check_branch
    %16 = sbr.rel (0) target = $region17
  $region16: #{edee_forward.2} parent=0 // pred_region
    _
  $region17: #{edee_forward.2} parent=0 // pred_fallthru
    _
  %v18 = vld [vmem:[%s0] sm:$0xf]
  %v19 = vld [vmem:[%s1] sm:$0xff]
  %v20 = vld [vmem:[%s1 + $0x8] sm:$0xff]
  %v21 = vld [vmem:[%s1 + $0x10] sm:$0xff]
  %v22 = vld [vmem:[%s1 + $0x18] sm:$0xff]
  %v23 = vld [vmem:[%s1 + $0x20] sm:$0xff]
  %v24 = vld [vmem:[%s1 + $0x28] sm:$0xff]
  %v25 = vld [vmem:[%s1 + $0x30] sm:$0xff]
  %v26 = vld [vmem:[%s1 + $0x38] sm:$0xff]
  %v27 = vld [vmem:[%s3] sm:$0x3]
  %v29 = vlaneseq
  %v30 = vshrl.u32 %v29, 7
  %v31 = vsub.s32 0, %v30
  %v32 = vrot.slane %v27, %v31
  %v33 = vlaneseq
  %v34 = vshrl.u32 %v33, 7
  %v35 = vsub.s32 1, %v34
  %v36 = vrot.slane %v27, %v35
  %v47 = vunpack.c.l.b16 %v19
  %v48 = vunpack.c.h.b16 %v19
  %v49 = vunpack.c.l.b16 %v20
  %v50 = vunpack.c.h.b16 %v20
  %v51 = vunpack.c.l.b16 %v21
  %v52 = vunpack.c.h.b16 %v21
  %v53 = vunpack.c.l.b16 %v22
  %v54 = vunpack.c.h.b16 %v22
  %v55 = vunpack.c.l.b16 %v23
  %v56 = vunpack.c.h.b16 %v23
  %v57 = vunpack.c.l.b16 %v24
  %v58 = vunpack.c.h.b16 %v24
  %v59 = vunpack.c.l.b16 %v25
  %v60 = vunpack.c.h.b16 %v25
  %v61 = vunpack.c.l.b16 %v26
  %v62 = vunpack.c.h.b16 %v26
  %v63 = vpack.c.b16 %v49, %v47
  %v64 = vpack.c.b16 %v50, %v48
  %v65 = vpack.c.b16 %v53, %v51
  %v66 = vpack.c.b16 %v54, %v52
  %v67 = vpack.c.b16 %v57, %v55
  %v68 = vpack.c.b16 %v58, %v56
  %v69 = vpack.c.b16 %v61, %v59
  %v70 = vpack.c.b16 %v62, %v60
  %vm79 = vcmask 523264
  %v81 = vsel %vm79, %v18, 0
  %83 = vmatprep.subr.bf16.mxu0 %v64
  %84 = vmatpush1.bf16.msra.mxu0 %v63
  %85 = vmatprep.subr.bf16.mxu0 %v66
  %86 = vmatpush1.bf16.msra.mxu0 %v65
  %87 = vmatprep.subr.bf16.mxu0 %v68
  %88 = vmatpush1.bf16.msra.mxu0 %v67
  %89 = vmatprep.subr.bf16.mxu0 %v70
  %90 = vmatpush1.bf16.msra.mxu0 %v69
  %91 = vmatprep.subr.bf16.mxu0 0
  %92 = vmatpush1.bf16.msra.mxu0 0
  %93 = vmatprep.subr.bf16.mxu0 0
  %94 = vmatpush1.bf16.msra.mxu0 0
  %95 = vmatprep.subr.bf16.mxu0 0
  %96 = vmatpush1.bf16.msra.mxu0 0
  %97 = vmatprep.subr.bf16.mxu0 0
  %98 = vmatpush1.bf16.msra.mxu0 0
  %99 = vmatprep.subr.bf16.mxu0 0
  %100 = vmatpush1.bf16.msra.mxu0 0
  %101 = vmatprep.subr.bf16.mxu0 0
  %102 = vmatpush1.bf16.msra.mxu0 0
  %103 = vmatprep.subr.bf16.mxu0 0
  %104 = vmatpush1.bf16.msra.mxu0 0
  %105 = vmatprep.subr.bf16.mxu0 0
  %106 = vmatpush1.bf16.msra.mxu0 0
  %107 = vmatprep.subr.bf16.mxu0 0
  %108 = vmatpush1.bf16.msra.mxu0 0
  %109 = vmatprep.subr.bf16.mxu0 0
  %110 = vmatpush1.bf16.msra.mxu0 0
  %111 = vmatprep.subr.bf16.mxu0 0
  %112 = vmatpush1.bf16.msra.mxu0 0
  %113 = vmatprep.subr.bf16.mxu0 0
  %114 = vmatpush1.bf16.msra.mxu0 0
  %115 = vmatprep.mubr.bf16.mxu0 0
  %116 = vmatmul.mubr.bf16.gmra.mrb[0].mxu0 %v81
  %v117 = vpop.f32.mrb[0].mxu0
  %v118 = vadd.f32 %v32, %v117
  %v119 = vpop.f32.mrb[0].mxu0
  %v120 = vadd.f32 %v36, %v119
  %v121 = vpop.f32.mrb[0].mxu0
  %v122 = vpop.f32.mrb[0].mxu0
  %123 = vdwg.mxu0
  %124 = vst [vmem:[#allocation2] sm:$0xff] %v118
  %125 = vst [vmem:[#allocation2 + $0x8] sm:$0xff] %v120
  %v126 = vlaneseq
  %v127 = vand.u32 %v126, 127
  %v128 = vadd.s32 %v127, 128
  %vm129 = vcmp.lt.s32.totalorder %v127, 0
  %v130 = vsub.s32 0, %v127
  %v131 = vsel %vm129, %v130, %v127
  %v132 = vshrl.u32 %v131, 6
  %v133 = vand.u32 %v131, 63
  %v134 = vsub.s32 0, %v133
  %v135 = vsel %vm129, %v134, %v133
  %vm136 = vcmp.lt.s32.totalorder %v128, 0
  %v137 = vsub.s32 0, %v128
  %v138 = vsel %vm136, %v137, %v128
  %v139 = vshrl.u32 %v138, 6
  %v140 = vand.u32 %v138, 63
  %v141 = vsub.s32 0, %v140
  %v142 = vsel %vm136, %v141, %v140
  %vm143 = vcmp.ne.s32.totalorder %v135, 0
  %vm144 = vcmp.ne.s32.totalorder %v142, 0
  %vm145 = vcmp.lt.s32.totalorder %v135, 0
  %vm146 = vcmp.lt.s32.totalorder %v142, 0
  %vm147 = vmand %vm145, %vm143
  %vm148 = vmand %vm146, %vm144
  %v149 = vadd.s32 %v135, 64
  %v150 = vadd.s32 %v142, 64
  %v151 = vsel %vm147, %v149, %v135
  %v152 = vsel %vm148, %v150, %v142
  %vm153 = vcmp.lt.s32.totalorder %v151, 32
  %vm154 = vcmp.lt.s32.totalorder %v152, 32
  %v155 = vld [vmem:[%s2] sm:$0xff]
  %v156 = vld [vmem:[%s2 + $0x8] sm:$0xff]
  %v157 = vld [vmem:[%s2 + $0x10] sm:$0xff]
  %v158 = vld [vmem:[%s2 + $0x18] sm:$0xff]
  %v159 = vld [vmem:[%s2 + $0x20] sm:$0xff]
  %v160 = vld [vmem:[%s2 + $0x28] sm:$0xff]
  %v161 = vld [vmem:[%s2 + $0x30] sm:$0xff]
  %v162 = vld [vmem:[%s2 + $0x38] sm:$0xff]
  %v171 = vunpack.c.l.b16 %v155
  %v172 = vunpack.c.h.b16 %v155
  %v173 = vunpack.c.l.b16 %v156
  %v174 = vunpack.c.h.b16 %v156
  %v175 = vunpack.c.l.b16 %v157
  %v176 = vunpack.c.h.b16 %v157
  %v177 = vunpack.c.l.b16 %v158
  %v178 = vunpack.c.h.b16 %v158
  %v179 = vunpack.c.l.b16 %v159
  %v180 = vunpack.c.h.b16 %v159
  %v181 = vunpack.c.l.b16 %v160
  %v182 = vunpack.c.h.b16 %v160
  %v183 = vunpack.c.l.b16 %v161
  %v184 = vunpack.c.h.b16 %v161
  %v185 = vunpack.c.l.b16 %v162
  %v186 = vunpack.c.h.b16 %v162
  %v187 = vpack.c.b16 %v173, %v171
  %v188 = vpack.c.b16 %v174, %v172
  %v189 = vpack.c.b16 %v177, %v175
  %v190 = vpack.c.b16 %v178, %v176
  %v191 = vpack.c.b16 %v181, %v179
  %v192 = vpack.c.b16 %v182, %v180
  %v193 = vpack.c.b16 %v185, %v183
  %v194 = vpack.c.b16 %v186, %v184
  %v204 = vsel %vm79, 0, 0
  %206 = vmatprep.subr.bf16.mxu0 %v188
  %207 = vmatpush1.bf16.msra.mxu0 %v187
  %208 = vmatprep.subr.bf16.mxu0 %v190
  %209 = vmatpush1.bf16.msra.mxu0 %v189
  %210 = vmatprep.subr.bf16.mxu0 %v192
  %211 = vmatpush1.bf16.msra.mxu0 %v191
  %212 = vmatprep.subr.bf16.mxu0 %v194
  %213 = vmatpush1.bf16.msra.mxu0 %v193
  %214 = vmatprep.subr.bf16.mxu0 0
  %215 = vmatpush1.bf16.msra.mxu0 0
  %216 = vmatprep.subr.bf16.mxu0 0
  %217 = vmatpush1.bf16.msra.mxu0 0
  %218 = vmatprep.subr.bf16.mxu0 0
  %219 = vmatpush1.bf16.msra.mxu0 0
  %220 = vmatprep.subr.bf16.mxu0 0
  %221 = vmatpush1.bf16.msra.mxu0 0
  %222 = vmatprep.subr.bf16.mxu0 0
  %223 = vmatpush1.bf16.msra.mxu0 0
  %224 = vmatprep.subr.bf16.mxu0 0
  %225 = vmatpush1.bf16.msra.mxu0 0
  %226 = vmatprep.subr.bf16.mxu0 0
  %227 = vmatpush1.bf16.msra.mxu0 0
  %228 = vmatprep.subr.bf16.mxu0 0
  %229 = vmatpush1.bf16.msra.mxu0 0
  %230 = vmatprep.subr.bf16.mxu0 0
  %231 = vmatpush1.bf16.msra.mxu0 0
  %232 = vmatprep.subr.bf16.mxu0 0
  %233 = vmatpush1.bf16.msra.mxu0 0
  %234 = vmatprep.subr.bf16.mxu0 0
  %235 = vmatpush1.bf16.msra.mxu0 0
  %236 = vmatprep.subr.bf16.mxu0 0
  %237 = vmatpush1.bf16.msra.mxu0 0
  %238 = vmatprep.mubr.bf16.mxu0 0
  %239 = vmatmul.mubr.bf16.gmra.mrb[0].mxu0 %v204
  %v240 = vpop.f32.mrb[0].mxu0
  %v241 = vadd.f32 0.0, %v240
  %v242 = vpop.f32.mrb[0].mxu0
  %v243 = vadd.f32 0.0, %v242
  %v244 = vpop.f32.mrb[0].mxu0
  %v245 = vpop.f32.mrb[0].mxu0
  %246 = vdwg.mxu0
  %v247 = vld [vmem:[#allocation2] ss:$8 sm:$0x3]
  %s248 = scalar_lea.vmem [#allocation2], 7
  %v249 = vld [vmem:[%s248] ss:$8 sm:$0x3]
  %v251 = vlaneseq
  %v252 = vshrl.u32 %v251, 7
  %v253 = vsub.s32 0, %v252
  %v254 = vrot.slane %v247, %v253
  %v255 = vlaneseq
  %v256 = vshrl.u32 %v255, 7
  %v257 = vsub.s32 1, %v256
  %v258 = vrot.slane %v247, %v257
  %v262 = vlaneseq
  %v263 = vshrl.u32 %v262, 7
  %v264 = vsub.s32 0, %v263
  %v265 = vrot.slane %v249, %v264
  %v266 = vlaneseq
  %v267 = vshrl.u32 %v266, 7
  %v268 = vsub.s32 1, %v267
  %v269 = vrot.slane %v249, %v268
  %v272 = vsel %vm153, %v254, %v265
  %v273 = vsel %vm154, %v258, %v269
  %v274 = vadd.f32 %v272, %v241
  %v275 = vadd.f32 %v273, %v243
  %v276 = vxor.u32 %v274, 2147483648
  %v277 = vmul.f32 %v276, 1.442695
  %v278 = vpow.pop %v277
  %v279 = vadd.f32 %v278, 1.0
  %v280 = vrcp.pop %v279
  %v281 = vmul.f32 1.0, %v280
  %v282 = vtanh.pop %v275
  %v283 = vxor.u32 %v275, 2147483648
  %v284 = vmul.f32 %v283, 1.442695
  %v285 = vpow.pop %v284
  %v286 = vadd.f32 %v285, 1.0
  %v287 = vrcp.pop %v286
  %v288 = vmul.f32 1.0, %v287
  %v289 = vmul.f32 %v281, 0.0
  %v290 = vmul.f32 %v281, %v282
  %292 = vrot.lane.b32.xlu0 %v290, 64
  %v293 = vpop.permute.xlu0 %292
  %v295 = vadd.f32 %v289, %v293
  %v296 = vtanh.pop %v295
  %v297 = vmul.f32 %v288, %v296
  %v298 = vpack.c.bf16 %v297, %v297
  %300 = vrot.lane.b32.xlu0 %v298, 64
  %v301 = vpop.permute.xlu0 %300
  %v303 = vsel %vm79, %v301, 0
  %305 = vmatprep.subr.bf16.mxu0 %v188
  %306 = vmatpush1.bf16.msra.mxu0 %v187
  %307 = vmatprep.subr.bf16.mxu0 %v190
  %308 = vmatpush1.bf16.msra.mxu0 %v189
  %309 = vmatprep.subr.bf16.mxu0 %v192
  %310 = vmatpush1.bf16.msra.mxu0 %v191
  %311 = vmatprep.subr.bf16.mxu0 %v194
  %312 = vmatpush1.bf16.msra.mxu0 %v193
  %313 = vmatprep.subr.bf16.mxu0 0
  %314 = vmatpush1.bf16.msra.mxu0 0
  %315 = vmatprep.subr.bf16.mxu0 0
  %316 = vmatpush1.bf16.msra.mxu0 0
  %317 = vmatprep.subr.bf16.mxu0 0
  %318 = vmatpush1.bf16.msra.mxu0 0
  %319 = vmatprep.subr.bf16.mxu0 0
  %320 = vmatpush1.bf16.msra.mxu0 0
  %321 = vmatprep.subr.bf16.mxu0 0
  %322 = vmatpush1.bf16.msra.mxu0 0
  %323 = vmatprep.subr.bf16.mxu0 0
  %324 = vmatpush1.bf16.msra.mxu0 0
  %325 = vmatprep.subr.bf16.mxu0 0
  %326 = vmatpush1.bf16.msra.mxu0 0
  %327 = vmatprep.subr.bf16.mxu0 0
  %328 = vmatpush1.bf16.msra.mxu0 0
  %329 = vmatprep.subr.bf16.mxu0 0
  %330 = vmatpush1.bf16.msra.mxu0 0
  %331 = vmatprep.subr.bf16.mxu0 0
  %332 = vmatpush1.bf16.msra.mxu0 0
  %333 = vmatprep.subr.bf16.mxu0 0
  %334 = vmatpush1.bf16.msra.mxu0 0
  %335 = vmatprep.subr.bf16.mxu0 0
  %336 = vmatpush1.bf16.msra.mxu0 0
  %337 = vmatprep.mubr.bf16.mxu0 0
  %338 = vmatmul.mubr.bf16.gmra.mrb[0].mxu0 %v303
  %v339 = vpop.f32.mrb[0].mxu0
  %v340 = vadd.f32 0.0, %v339
  %v341 = vpop.f32.mrb[0].mxu0
  %v342 = vadd.f32 0.0, %v341
  %v343 = vpop.f32.mrb[0].mxu0
  %v344 = vpop.f32.mrb[0].mxu0
  %345 = vdwg.mxu0
  %s346 = scalar_lea.vmem [#allocation2], 1
  %v347 = vld [vmem:[%s346] ss:$8 sm:$0x3]
  %s348 = scalar_lea.vmem [#allocation2], 6
  %v349 = vld [vmem:[%s348] ss:$8 sm:$0x3]
  %v351 = vlaneseq
  %v352 = vshrl.u32 %v351, 7
  %v353 = vsub.s32 0, %v352
  %v354 = vrot.slane %v347, %v353
  %v355 = vlaneseq
  %v356 = vshrl.u32 %v355, 7
  %v357 = vsub.s32 1, %v356
  %v358 = vrot.slane %v347, %v357
  %v362 = vlaneseq
  %v363 = vshrl.u32 %v362, 7
  %v364 = vsub.s32 0, %v363
  %v365 = vrot.slane %v349, %v364
  %v366 = vlaneseq
  %v367 = vshrl.u32 %v366, 7
  %v368 = vsub.s32 1, %v367
  %v369 = vrot.slane %v349, %v368
  %v372 = vsel %vm153, %v354, %v365
  %v373 = vsel %vm154, %v358, %v369
  %v374 = vadd.f32 %v372, %v340
  %v375 = vadd.f32 %v373, %v342
  %v376 = vxor.u32 %v374, 2147483648
  %v377 = vmul.f32 %v376, 1.442695
  %v378 = vpow.pop %v377
  %v379 = vadd.f32 %v378, 1.0
  %v380 = vrcp.pop %v379
  %v381 = vmul.f32 1.0, %v380
  %v382 = vtanh.pop %v375
  %v383 = vxor.u32 %v375, 2147483648
  %v384 = vmul.f32 %v383, 1.442695
  %v385 = vpow.pop %v384
  %v386 = vadd.f32 %v385, 1.0
  %v387 = vrcp.pop %v386
  %v388 = vmul.f32 1.0, %v387
  %v389 = vmul.f32 %v381, %v295
  %v390 = vmul.f32 %v381, %v382
  %392 = vrot.lane.b32.xlu0 %v390, 64
  %v393 = vpop.permute.xlu0 %392
  %v395 = vadd.f32 %v389, %v393
  %v396 = vtanh.pop %v395
  %v397 = vmul.f32 %v388, %v396
  %v398 = vpack.c.bf16 %v397, %v397
  %400 = vrot.lane.b32.xlu0 %v398, 64
  %v401 = vpop.permute.xlu0 %400
  %v403 = vsel %vm79, %v401, 0
  %405 = vmatprep.subr.bf16.mxu0 %v188
  %406 = vmatpush1.bf16.msra.mxu0 %v187
  %407 = vmatprep.subr.bf16.mxu0 %v190
  %408 = vmatpush1.bf16.msra.mxu0 %v189
  %409 = vmatprep.subr.bf16.mxu0 %v192
  %410 = vmatpush1.bf16.msra.mxu0 %v191
  %411 = vmatprep.subr.bf16.mxu0 %v194
  %412 = vmatpush1.bf16.msra.mxu0 %v193
  %413 = vmatprep.subr.bf16.mxu0 0
  %414 = vmatpush1.bf16.msra.mxu0 0
  %415 = vmatprep.subr.bf16.mxu0 0
  %416 = vmatpush1.bf16.msra.mxu0 0
  %417 = vmatprep.subr.bf16.mxu0 0
  %418 = vmatpush1.bf16.msra.mxu0 0
  %419 = vmatprep.subr.bf16.mxu0 0
  %420 = vmatpush1.bf16.msra.mxu0 0
  %421 = vmatprep.subr.bf16.mxu0 0
  %422 = vmatpush1.bf16.msra.mxu0 0
  %423 = vmatprep.subr.bf16.mxu0 0
  %424 = vmatpush1.bf16.msra.mxu0 0
  %425 = vmatprep.subr.bf16.mxu0 0
  %426 = vmatpush1.bf16.msra.mxu0 0
  %427 = vmatprep.subr.bf16.mxu0 0
  %428 = vmatpush1.bf16.msra.mxu0 0
  %429 = vmatprep.subr.bf16.mxu0 0
  %430 = vmatpush1.bf16.msra.mxu0 0
  %431 = vmatprep.subr.bf16.mxu0 0
  %432 = vmatpush1.bf16.msra.mxu0 0
  %433 = vmatprep.subr.bf16.mxu0 0
  %434 = vmatpush1.bf16.msra.mxu0 0
  %435 = vmatprep.subr.bf16.mxu0 0
  %436 = vmatpush1.bf16.msra.mxu0 0
  %437 = vmatprep.mubr.bf16.mxu0 0
  %438 = vmatmul.mubr.bf16.gmra.mrb[0].mxu0 %v403
  %v439 = vpop.f32.mrb[0].mxu0
  %v440 = vadd.f32 0.0, %v439
  %v441 = vpop.f32.mrb[0].mxu0
  %v442 = vadd.f32 0.0, %v441
  %v443 = vpop.f32.mrb[0].mxu0
  %v444 = vpop.f32.mrb[0].mxu0
  %445 = vdwg.mxu0
  %s446 = scalar_lea.vmem [#allocation2], 2
  %v447 = vld [vmem:[%s446] ss:$8 sm:$0x3]
  %s448 = scalar_lea.vmem [#allocation2], 5
  %v449 = vld [vmem:[%s448] ss:$8 sm:$0x3]
  %v451 = vlaneseq
  %v452 = vshrl.u32 %v451, 7
  %v453 = vsub.s32 0, %v452
  %v454 = vrot.slane %v447, %v453
  %v455 = vlaneseq
  %v456 = vshrl.u32 %v455, 7
  %v457 = vsub.s32 1, %v456
  %v458 = vrot.slane %v447, %v457
  %v462 = vlaneseq
  %v463 = vshrl.u32 %v462, 7
  %v464 = vsub.s32 0, %v463
  %v465 = vrot.slane %v449, %v464
  %v466 = vlaneseq
  %v467 = vshrl.u32 %v466, 7
  %v468 = vsub.s32 1, %v467
  %v469 = vrot.slane %v449, %v468
  %v472 = vsel %vm153, %v454, %v465
  %v473 = vsel %vm154, %v458, %v469
  %v474 = vadd.f32 %v472, %v440
  %v475 = vadd.f32 %v473, %v442
  %v476 = vxor.u32 %v474, 2147483648
  %v477 = vmul.f32 %v476, 1.442695
  %v478 = vpow.pop %v477
  %v479 = vadd.f32 %v478, 1.0
  %v480 = vrcp.pop %v479
  %v481 = vmul.f32 1.0, %v480
  %v482 = vtanh.pop %v475
  %v483 = vxor.u32 %v475, 2147483648
  %v484 = vmul.f32 %v483, 1.442695
  %v485 = vpow.pop %v484
  %v486 = vadd.f32 %v485, 1.0
  %v487 = vrcp.pop %v486
  %v488 = vmul.f32 1.0, %v487
  %v489 = vmul.f32 %v481, %v395
  %v490 = vmul.f32 %v481, %v482
  %492 = vrot.lane.b32.xlu0 %v490, 64
  %v493 = vpop.permute.xlu0 %492
  %v495 = vadd.f32 %v489, %v493
  %v496 = vtanh.pop %v495
  %v497 = vmul.f32 %v488, %v496
  %v498 = vpack.c.bf16 %v497, %v497
  %500 = vrot.lane.b32.xlu0 %v498, 64
  %v501 = vpop.permute.xlu0 %500
  %v503 = vsel %vm79, %v501, 0
  %505 = vmatprep.subr.bf16.mxu0 %v188
  %506 = vmatpush1.bf16.msra.mxu0 %v187
  %507 = vmatprep.subr.bf16.mxu0 %v190
  %508 = vmatpush1.bf16.msra.mxu0 %v189
  %509 = vmatprep.subr.bf16.mxu0 %v192
  %510 = vmatpush1.bf16.msra.mxu0 %v191
  %511 = vmatprep.subr.bf16.mxu0 %v194
  %512 = vmatpush1.bf16.msra.mxu0 %v193
  %513 = vmatprep.subr.bf16.mxu0 0
  %514 = vmatpush1.bf16.msra.mxu0 0
  %515 = vmatprep.subr.bf16.mxu0 0
  %516 = vmatpush1.bf16.msra.mxu0 0
  %517 = vmatprep.subr.bf16.mxu0 0
  %518 = vmatpush1.bf16.msra.mxu0 0
  %519 = vmatprep.subr.bf16.mxu0 0
  %520 = vmatpush1.bf16.msra.mxu0 0
  %521 = vmatprep.subr.bf16.mxu0 0
  %522 = vmatpush1.bf16.msra.mxu0 0
  %523 = vmatprep.subr.bf16.mxu0 0
  %524 = vmatpush1.bf16.msra.mxu0 0
  %525 = vmatprep.subr.bf16.mxu0 0
  %526 = vmatpush1.bf16.msra.mxu0 0
  %527 = vmatprep.subr.bf16.mxu0 0
  %528 = vmatpush1.bf16.msra.mxu0 0
  %529 = vmatprep.subr.bf16.mxu0 0
  %530 = vmatpush1.bf16.msra.mxu0 0
  %531 = vmatprep.subr.bf16.mxu0 0
  %532 = vmatpush1.bf16.msra.mxu0 0
  %533 = vmatprep.subr.bf16.mxu0 0
  %534 = vmatpush1.bf16.msra.mxu0 0
  %535 = vmatprep.subr.bf16.mxu0 0
  %536 = vmatpush1.bf16.msra.mxu0 0
  %537 = vmatprep.mubr.bf16.mxu0 0
  %538 = vmatmul.mubr.bf16.gmra.mrb[0].mxu0 %v503
  %v539 = vpop.f32.mrb[0].mxu0
  %v540 = vadd.f32 0.0, %v539
  %v541 = vpop.f32.mrb[0].mxu0
  %v542 = vadd.f32 0.0, %v541
  %v543 = vpop.f32.mrb[0].mxu0
  %v544 = vpop.f32.mrb[0].mxu0
  %545 = vdwg.mxu0
  %s546 = scalar_lea.vmem [#allocation2], 3
  %v547 = vld [vmem:[%s546] ss:$8 sm:$0x3]
  %s548 = scalar_lea.vmem [#allocation2], 4
  %v549 = vld [vmem:[%s548] ss:$8 sm:$0x3]
  %v551 = vlaneseq
  %v552 = vshrl.u32 %v551, 7
  %v553 = vsub.s32 0, %v552
  %v554 = vrot.slane %v547, %v553
  %v555 = vlaneseq
  %v556 = vshrl.u32 %v555, 7
  %v557 = vsub.s32 1, %v556
  %v558 = vrot.slane %v547, %v557
  %v562 = vlaneseq
  %v563 = vshrl.u32 %v562, 7
  %v564 = vsub.s32 0, %v563
  %v565 = vrot.slane %v549, %v564
  %v566 = vlaneseq
  %v567 = vshrl.u32 %v566, 7
  %v568 = vsub.s32 1, %v567
  %v569 = vrot.slane %v549, %v568
  %v572 = vsel %vm153, %v554, %v565
  %v573 = vsel %vm154, %v558, %v569
  %v574 = vadd.f32 %v572, %v540
  %v575 = vadd.f32 %v573, %v542
  %v576 = vxor.u32 %v574, 2147483648
  %v577 = vmul.f32 %v576, 1.442695
  %v578 = vpow.pop %v577
  %v579 = vadd.f32 %v578, 1.0
  %v580 = vrcp.pop %v579
  %v581 = vmul.f32 1.0, %v580
  %v582 = vtanh.pop %v575
  %v583 = vxor.u32 %v575, 2147483648
  %v584 = vmul.f32 %v583, 1.442695
  %v585 = vpow.pop %v584
  %v586 = vadd.f32 %v585, 1.0
  %v587 = vrcp.pop %v586
  %v588 = vmul.f32 1.0, %v587
  %v589 = vmul.f32 %v581, %v495
  %v590 = vmul.f32 %v581, %v582
  %592 = vrot.lane.b32.xlu0 %v590, 64
  %v593 = vpop.permute.xlu0 %592
  %v595 = vadd.f32 %v589, %v593
  %v596 = vtanh.pop %v595
  %v597 = vmul.f32 %v588, %v596
  %v598 = vpack.c.bf16 %v597, %v597
  %600 = vrot.lane.b32.xlu0 %v598, 64
  %v601 = vpop.permute.xlu0 %600
  %v603 = vsel %vm79, %v601, 0
  %605 = vmatprep.subr.bf16.mxu0 %v188
  %606 = vmatpush1.bf16.msra.mxu0 %v187
  %607 = vmatprep.subr.bf16.mxu0 %v190
  %608 = vmatpush1.bf16.msra.mxu0 %v189
  %609 = vmatprep.subr.bf16.mxu0 %v192
  %610 = vmatpush1.bf16.msra.mxu0 %v191
  %611 = vmatprep.subr.bf16.mxu0 %v194
  %612 = vmatpush1.bf16.msra.mxu0 %v193
  %613 = vmatprep.subr.bf16.mxu0 0
  %614 = vmatpush1.bf16.msra.mxu0 0
  %615 = vmatprep.subr.bf16.mxu0 0
  %616 = vmatpush1.bf16.msra.mxu0 0
  %617 = vmatprep.subr.bf16.mxu0 0
  %618 = vmatpush1.bf16.msra.mxu0 0
  %619 = vmatprep.subr.bf16.mxu0 0
  %620 = vmatpush1.bf16.msra.mxu0 0
  %621 = vmatprep.subr.bf16.mxu0 0
  %622 = vmatpush1.bf16.msra.mxu0 0
  %623 = vmatprep.subr.bf16.mxu0 0
  %624 = vmatpush1.bf16.msra.mxu0 0
  %625 = vmatprep.subr.bf16.mxu0 0
  %626 = vmatpush1.bf16.msra.mxu0 0
  %627 = vmatprep.subr.bf16.mxu0 0
  %628 = vmatpush1.bf16.msra.mxu0 0
  %629 = vmatprep.subr.bf16.mxu0 0
  %630 = vmatpush1.bf16.msra.mxu0 0
  %631 = vmatprep.subr.bf16.mxu0 0
  %632 = vmatpush1.bf16.msra.mxu0 0
  %633 = vmatprep.subr.bf16.mxu0 0
  %634 = vmatpush1.bf16.msra.mxu0 0
  %635 = vmatprep.subr.bf16.mxu0 0
  %636 = vmatpush1.bf16.msra.mxu0 0
  %637 = vmatprep.mubr.bf16.mxu0 0
  %638 = vmatmul.mubr.bf16.gmra.mrb[0].mxu0 %v603
  %v639 = vpop.f32.mrb[0].mxu0
  %v640 = vadd.f32 0.0, %v639
  %v641 = vpop.f32.mrb[0].mxu0
  %v642 = vadd.f32 0.0, %v641
  %v643 = vpop.f32.mrb[0].mxu0
  %v644 = vpop.f32.mrb[0].mxu0
  %645 = vdwg.mxu0
  %v646 = vsel %vm153, %v565, %v554
  %v647 = vsel %vm154, %v569, %v558
  %v648 = vadd.f32 %v646, %v640
  %v649 = vadd.f32 %v647, %v642
  %v650 = vxor.u32 %v648, 2147483648
  %v651 = vmul.f32 %v650, 1.442695
  %v652 = vpow.pop %v651
  %v653 = vadd.f32 %v652, 1.0
  %v654 = vrcp.pop %v653
  %v655 = vmul.f32 1.0, %v654
  %v656 = vtanh.pop %v649
  %v657 = vxor.u32 %v649, 2147483648
  %v658 = vmul.f32 %v657, 1.442695
  %v659 = vpow.pop %v658
  %v660 = vadd.f32 %v659, 1.0
  %v661 = vrcp.pop %v660
  %v662 = vmul.f32 1.0, %v661
  %v663 = vmul.f32 %v655, %v595
  %v664 = vmul.f32 %v655, %v656
  %666 = vrot.lane.b32.xlu0 %v664, 64
  %v667 = vpop.permute.xlu0 %666
  %v669 = vadd.f32 %v663, %v667
  %v670 = vtanh.pop %v669
  %v671 = vmul.f32 %v662, %v670
  %v672 = vpack.c.bf16 %v671, %v671
  %674 = vrot.lane.b32.xlu0 %v672, 64
  %v675 = vpop.permute.xlu0 %674
  %v677 = vsel %vm79, %v675, 0
  %679 = vmatprep.subr.bf16.mxu0 %v188
  %680 = vmatpush1.bf16.msra.mxu0 %v187
  %681 = vmatprep.subr.bf16.mxu0 %v190
  %682 = vmatpush1.bf16.msra.mxu0 %v189
  %683 = vmatprep.subr.bf16.mxu0 %v192
  %684 = vmatpush1.bf16.msra.mxu0 %v191
  %685 = vmatprep.subr.bf16.mxu0 %v194
  %686 = vmatpush1.bf16.msra.mxu0 %v193
  %687 = vmatprep.subr.bf16.mxu0 0
  %688 = vmatpush1.bf16.msra.mxu0 0
  %689 = vmatprep.subr.bf16.mxu0 0
  %690 = vmatpush1.bf16.msra.mxu0 0
  %691 = vmatprep.subr.bf16.mxu0 0
  %692 = vmatpush1.bf16.msra.mxu0 0
  %693 = vmatprep.subr.bf16.mxu0 0
  %694 = vmatpush1.bf16.msra.mxu0 0
  %695 = vmatprep.subr.bf16.mxu0 0
  %696 = vmatpush1.bf16.msra.mxu0 0
  %697 = vmatprep.subr.bf16.mxu0 0
  %698 = vmatpush1.bf16.msra.mxu0 0
  %699 = vmatprep.subr.bf16.mxu0 0
  %700 = vmatpush1.bf16.msra.mxu0 0
  %701 = vmatprep.subr.bf16.mxu0 0
  %702 = vmatpush1.bf16.msra.mxu0 0
  %703 = vmatprep.subr.bf16.mxu0 0
  %704 = vmatpush1.bf16.msra.mxu0 0
  %705 = vmatprep.subr.bf16.mxu0 0
  %706 = vmatpush1.bf16.msra.mxu0 0
  %707 = vmatprep.subr.bf16.mxu0 0
  %708 = vmatpush1.bf16.msra.mxu0 0
  %709 = vmatprep.subr.bf16.mxu0 0
  %710 = vmatpush1.bf16.msra.mxu0 0
  %711 = vmatprep.mubr.bf16.mxu0 0
  %712 = vmatmul.mubr.bf16.gmra.mrb[0].mxu0 %v677
  %v713 = vpop.f32.mrb[0].mxu0
  %v714 = vadd.f32 0.0, %v713
  %v715 = vpop.f32.mrb[0].mxu0
  %v716 = vadd.f32 0.0, %v715
  %v717 = vpop.f32.mrb[0].mxu0
  %v718 = vpop.f32.mrb[0].mxu0
  %719 = vdwg.mxu0
  %v720 = vsel %vm153, %v465, %v454
  %v721 = vsel %vm154, %v469, %v458
  %v722 = vadd.f32 %v720, %v714
  %v723 = vadd.f32 %v721, %v716
  %v724 = vxor.u32 %v722, 2147483648
  %v725 = vmul.f32 %v724, 1.442695
  %v726 = vpow.pop %v725
  %v727 = vadd.f32 %v726, 1.0
  %v728 = vrcp.pop %v727
  %v729 = vmul.f32 1.0, %v728
  %v730 = vtanh.pop %v723
  %v731 = vxor.u32 %v723, 2147483648
  %v732 = vmul.f32 %v731, 1.442695
  %v733 = vpow.pop %v732
  %v734 = vadd.f32 %v733, 1.0
  %v735 = vrcp.pop %v734
  %v736 = vmul.f32 1.0, %v735
  %v737 = vmul.f32 %v729, %v669
  %v738 = vmul.f32 %v729, %v730
  %740 = vrot.lane.b32.xlu0 %v738, 64
  %v741 = vpop.permute.xlu0 %740
  %v743 = vadd.f32 %v737, %v741
  %v744 = vtanh.pop %v743
  %v745 = vmul.f32 %v736, %v744
  %v746 = vpack.c.bf16 %v745, %v745
  %748 = vrot.lane.b32.xlu0 %v746, 64
  %v749 = vpop.permute.xlu0 %748
  %v751 = vsel %vm79, %v749, 0
  %753 = vmatprep.subr.bf16.mxu0 %v188
  %754 = vmatpush1.bf16.msra.mxu0 %v187
  %755 = vmatprep.subr.bf16.mxu0 %v190
  %756 = vmatpush1.bf16.msra.mxu0 %v189
  %757 = vmatprep.subr.bf16.mxu0 %v192
  %758 = vmatpush1.bf16.msra.mxu0 %v191
  %759 = vmatprep.subr.bf16.mxu0 %v194
  %760 = vmatpush1.bf16.msra.mxu0 %v193
  %761 = vmatprep.subr.bf16.mxu0 0
  %762 = vmatpush1.bf16.msra.mxu0 0
  %763 = vmatprep.subr.bf16.mxu0 0
  %764 = vmatpush1.bf16.msra.mxu0 0
  %765 = vmatprep.subr.bf16.mxu0 0
  %766 = vmatpush1.bf16.msra.mxu0 0
  %767 = vmatprep.subr.bf16.mxu0 0
  %768 = vmatpush1.bf16.msra.mxu0 0
  %769 = vmatprep.subr.bf16.mxu0 0
  %770 = vmatpush1.bf16.msra.mxu0 0
  %771 = vmatprep.subr.bf16.mxu0 0
  %772 = vmatpush1.bf16.msra.mxu0 0
  %773 = vmatprep.subr.bf16.mxu0 0
  %774 = vmatpush1.bf16.msra.mxu0 0
  %775 = vmatprep.subr.bf16.mxu0 0
  %776 = vmatpush1.bf16.msra.mxu0 0
  %777 = vmatprep.subr.bf16.mxu0 0
  %778 = vmatpush1.bf16.msra.mxu0 0
  %779 = vmatprep.subr.bf16.mxu0 0
  %780 = vmatpush1.bf16.msra.mxu0 0
  %781 = vmatprep.subr.bf16.mxu0 0
  %782 = vmatpush1.bf16.msra.mxu0 0
  %783 = vmatprep.subr.bf16.mxu0 0
  %784 = vmatpush1.bf16.msra.mxu0 0
  %785 = vmatprep.mubr.bf16.mxu0 0
  %786 = vmatmul.mubr.bf16.gmra.mrb[0].mxu0 %v751
  %v787 = vpop.f32.mrb[0].mxu0
  %v788 = vadd.f32 0.0, %v787
  %v789 = vpop.f32.mrb[0].mxu0
  %v790 = vadd.f32 0.0, %v789
  %v791 = vpop.f32.mrb[0].mxu0
  %v792 = vpop.f32.mrb[0].mxu0
  %793 = vdwg.mxu0
  %v794 = vsel %vm153, %v365, %v354
  %v795 = vsel %vm154, %v369, %v358
  %v796 = vadd.f32 %v794, %v788
  %v797 = vadd.f32 %v795, %v790
  %v798 = vxor.u32 %v796, 2147483648
  %v799 = vmul.f32 %v798, 1.442695
  %v800 = vpow.pop %v799
  %v801 = vadd.f32 %v800, 1.0
  %v802 = vrcp.pop %v801
  %v803 = vmul.f32 1.0, %v802
  %v804 = vtanh.pop %v797
  %v805 = vxor.u32 %v797, 2147483648
  %v806 = vmul.f32 %v805, 1.442695
  %v807 = vpow.pop %v806
  %v808 = vadd.f32 %v807, 1.0
  %v809 = vrcp.pop %v808
  %v810 = vmul.f32 1.0, %v809
  %v811 = vmul.f32 %v803, %v743
  %v812 = vmul.f32 %v803, %v804
  %814 = vrot.lane.b32.xlu0 %v812, 64
  %v815 = vpop.permute.xlu0 %814
  %v817 = vadd.f32 %v811, %v815
  %v818 = vtanh.pop %v817
  %v819 = vmul.f32 %v810, %v818
  %v820 = vpack.c.bf16 %v819, %v819
  %822 = vrot.lane.b32.xlu0 %v820, 64
  %v823 = vpop.permute.xlu0 %822
  %v825 = vsel %vm79, %v823, 0
  %827 = vmatprep.subr.bf16.mxu0 %v188
  %828 = vmatpush1.bf16.msra.mxu0 %v187
  %829 = vmatprep.subr.bf16.mxu0 %v190
  %830 = vmatpush1.bf16.msra.mxu0 %v189
  %831 = vmatprep.subr.bf16.mxu0 %v192
  %832 = vmatpush1.bf16.msra.mxu0 %v191
  %833 = vmatprep.subr.bf16.mxu0 %v194
  %834 = vmatpush1.bf16.msra.mxu0 %v193
  %835 = vmatprep.subr.bf16.mxu0 0
  %836 = vmatpush1.bf16.msra.mxu0 0
  %837 = vmatprep.subr.bf16.mxu0 0
  %838 = vmatpush1.bf16.msra.mxu0 0
  %839 = vmatprep.subr.bf16.mxu0 0
  %840 = vmatpush1.bf16.msra.mxu0 0
  %841 = vmatprep.subr.bf16.mxu0 0
  %842 = vmatpush1.bf16.msra.mxu0 0
  %843 = vmatprep.subr.bf16.mxu0 0
  %844 = vmatpush1.bf16.msra.mxu0 0
  %845 = vmatprep.subr.bf16.mxu0 0
  %846 = vmatpush1.bf16.msra.mxu0 0
  %847 = vmatprep.subr.bf16.mxu0 0
  %848 = vmatpush1.bf16.msra.mxu0 0
  %849 = vmatprep.subr.bf16.mxu0 0
  %850 = vmatpush1.bf16.msra.mxu0 0
  %851 = vmatprep.subr.bf16.mxu0 0
  %852 = vmatpush1.bf16.msra.mxu0 0
  %853 = vmatprep.subr.bf16.mxu0 0
  %854 = vmatpush1.bf16.msra.mxu0 0
  %855 = vmatprep.subr.bf16.mxu0 0
  %856 = vmatpush1.bf16.msra.mxu0 0
  %857 = vmatprep.subr.bf16.mxu0 0
  %858 = vmatpush1.bf16.msra.mxu0 0
  %859 = vmatprep.mubr.bf16.mxu0 0
  %860 = vmatmul.mubr.bf16.gmra.mrb[0].mxu0 %v825
  %v861 = vpop.f32.mrb[0].mxu0
  %v862 = vadd.f32 0.0, %v861
  %v863 = vpop.f32.mrb[0].mxu0
  %v864 = vadd.f32 0.0, %v863
  %v865 = vpop.f32.mrb[0].mxu0
  %v866 = vpop.f32.mrb[0].mxu0
  %867 = vdwg.mxu0
  %v868 = vsel %vm153, %v265, %v254
  %v869 = vsel %vm154, %v269, %v258
  %v870 = vadd.f32 %v868, %v862
  %v871 = vadd.f32 %v869, %v864
  %v872 = vxor.u32 %v870, 2147483648
  %v873 = vmul.f32 %v872, 1.442695
  %v874 = vpow.pop %v873
  %v875 = vadd.f32 %v874, 1.0
  %v876 = vrcp.pop %v875
  %v877 = vmul.f32 1.0, %v876
  %v878 = vtanh.pop %v871
  %v879 = vxor.u32 %v871, 2147483648
  %v880 = vmul.f32 %v879, 1.442695
  %v881 = vpow.pop %v880
  %v882 = vadd.f32 %v881, 1.0
  %v883 = vrcp.pop %v882
  %v884 = vmul.f32 1.0, %v883
  %v885 = vmul.f32 %v877, %v817
  %v886 = vmul.f32 %v877, %v878
  %888 = vrot.lane.b32.xlu0 %v886, 64
  %v889 = vpop.permute.xlu0 %888
  %v891 = vadd.f32 %v885, %v889
  %v892 = vtanh.pop %v891
  %v893 = vmul.f32 %v884, %v892
  %v895 = vrot.slane %v397, 7
  %v898 = vrot.slane %v497, 6
  %v901 = vrot.slane %v597, 5
  %v904 = vrot.slane %v671, 4
  %v907 = vrot.slane %v745, 3
  %v910 = vrot.slane %v819, 2
  %v913 = vrot.slane %v893, 1
  %vm915 = vcmask 1040384
  %v916 = vsel %vm915, %v297, %v895
  %vm917 = vcmask 1041408
  %v918 = vsel %vm917, %v916, %v898
  %vm919 = vcmask 1042432
  %v920 = vsel %vm919, %v918, %v901
  %vm921 = vcmask 1043456
  %v922 = vsel %vm921, %v920, %v904
  %vm923 = vcmask 1044480
  %v924 = vsel %vm923, %v922, %v907
  %vm925 = vcmask 1045504
  %v926 = vsel %vm925, %v924, %v910
  %vm927 = vcmask 1046528
  %v928 = vsel %vm927, %v926, %v913
  %v929 = vpack.c.bf16 %v928, %v928
  %v931 = vunpack.c.l.b16 %v929
  %v932 = vpack.c.b16 %v931, %v931
  %933 = vrot.lane.b32.xlu0 %v932, 64
  %v934 = vpop.permute.xlu0 %933
  %vm936 = vcmask 257024
  %937 = vst.msk [vmem:[%s4] sm:$0xf] %vm936, %v934
  %v938 = vrot.slane %v819, 7
  %v940 = vrot.slane %v745, 6
  %v942 = vrot.slane %v671, 5
  %v944 = vrot.slane %v597, 4
  %v946 = vrot.slane %v497, 3
  %v948 = vrot.slane %v397, 2
  %v951 = vrot.slane %v297, 1
  %v953 = vsel %vm915, %v893, %v938
  %v954 = vsel %vm917, %v953, %v940
  %v955 = vsel %vm919, %v954, %v942
  %v956 = vsel %vm921, %v955, %v944
  %v957 = vsel %vm923, %v956, %v946
  %v958 = vsel %vm925, %v957, %v948
  %v959 = vsel %vm927, %v958, %v951
  %v960 = vpack.c.bf16 %v959, %v959
  %v962 = vunpack.c.l.b16 %v960
  %v963 = vpack.c.b16 %v962, %v962
  %964 = vrot.lane.b32.xlu0 %v963, 64
  %v965 = vpop.permute.xlu0 %964
  %vm967 = vcmask 519424
  %968 = vst.msk [vmem:[%s4] sm:$0xf] %vm967, %v965
  // Predicated region
  $region18: #{edee_forward.2} parent=0 // pred_check
    _
  $region19: #{edee_forward.2} parent=0 // pred_check_branch
    %970 = sbr.rel (0) target = $region21
  $region20: #{edee_forward.2} parent=0 // pred_region
    _
  $region21: #{edee_forward.2} parent=0 // pred_fallthru
    _
  // Predicated region
  $region22: #{edee_forward.2} parent=0 // pred_check
    _
  $region23: #{edee_forward.2} parent=0 // pred_check_branch
    %972 = sbr.rel (0) target = $region25
  $region24: #{edee_forward.2} parent=0 // pred_region
    _
  $region25: #{edee_forward.2} parent=0 // pred_fallthru
    _

</llo_original>
